<compile_context>
chip_gen: v7x
topology: tpu7x:2x2x1
jax: 0.10.0
libtpu: 0.0.40
codegen_flags: <defaults>
</compile_context>

<pallas_src>
import functools

import numpy as np
import jax
import jax.numpy as jnp
from jax import lax
from jax.experimental import pallas as pl
from jax.experimental.pallas import tpu as pltpu


# ----------------------------------------------------------------------------
# Fused Pallas kernel
# ----------------------------------------------------------------------------
def _elu(x):
    # PyTorch ELU(alpha=1). exp(x)-1 (not expm1): abs error < f32 eps for this
    # range; revisit if bf16 activations are adopted.
    return jnp.where(x > 0, x, jnp.exp(x) - 1.0)


def _mlp2(x, w1, b1, w2, b2):
    # y = Linear2(ELU(Linear1(x))); weights pre-transposed to [in, out].
    h = jnp.dot(x, w1, preferred_element_type=jnp.float32) + b1
    h = _elu(h)
    return jnp.dot(h, w2, preferred_element_type=jnp.float32) + b2


def _fused_forward_kernel(
    gidx_ref,            # int32 [N, 1]   (sublane column -> MXU-natural one-hot)
    nseg_ref,            # int32 [1, N]   (lane-dense)
    sseg_ref,            # int32 [1, M]   (lane-dense)
    invc_ref,            # f32   [S, 1]   (precomputed 1/count per segment)
    graph_ref,           # f32   [G, Fn]
    snf_ref,             # f32   [N, Fin]
    sf_ref,              # f32   [M, Fs]
    w_ref,               # f32   [slab_rows, W]   packed weights/biases
    o_ref,               # f32   [S, W]           lane-padded output
    *, layout,
):
    G = graph_ref.shape[0]
    N = snf_ref.shape[0]
    M = sf_ref.shape[0]
    S = o_ref.shape[0]

    def w(i):            # true-width static view into the packed slab (zero cost)
        off, r, c = layout[i]
        return w_ref[off:off + r, :c]

    def w_pad(i):        # full slab-width view (out layer -> lane-padded output)
        off, r, _ = layout[i]
        return w_ref[off:off + r, :]

    # layout order: 0-3 nn, 4-7 modal1, 8-11 modal2, 12-15 feature_modal,
    #               16 o_w1f, 17 o_w1g, 18 o_b1, 19 o_w2(pad), 20 o_b2(pad)

    # ---- graph branch -------------------------------------------------------
    s_feat = _mlp2(snf_ref[...], w(0), w(1), w(2), w(3))

    # gather graph_out[gidx]: one-hot in MXU-natural [N, G] orientation so the
    # contraction is over the lane-minor dim of the LHS (no XLU transpose).
    # TODO(synk): for large G/N replace the one-hot gather with a scalar-prefetch
    # pl.Element row gather / per-row DMA (one-hot is O(N*G)).
    oh_g = (lax.broadcasted_iota(jnp.int32, (N, G), 1) == gidx_ref[...]
            ).astype(jnp.float32)                                      # [N, G]
    g_feat = jnp.dot(oh_g, graph_ref[...],
                     preferred_element_type=jnp.float32)               # [N, Fn]

    x = _mlp2(s_feat + g_feat, w(4), w(5), w(6), w(7))

    # segment-sum by compact node id: one MXU matmul with the [S, N] one-hot
    oh_n = (lax.broadcasted_iota(jnp.int32, (S, N), 0) == nseg_ref[...]
            ).astype(jnp.float32)                                      # [S, N]
    xg = jnp.dot(oh_n, x, preferred_element_type=jnp.float32)          # [S, E]
    out_graph = _mlp2(xg, w(8), w(9), w(10), w(11))

    # ---- sample-feature branch (segment mean; 1/count precomputed on host) ---
    oh_m = (lax.broadcasted_iota(jnp.int32, (S, M), 0) == sseg_ref[...]
            ).astype(jnp.float32)                                      # [S, M]
    sums = jnp.dot(oh_m, sf_ref[...], preferred_element_type=jnp.float32)  # [S, Fs]
    xf = sums * invc_ref[...]
    out_feature = _mlp2(xf, w(12), w(13), w(14), w(15))

    # ---- nn_out with split first-layer weight (concat folded away) ----------
    h = (jnp.dot(out_feature, w(16), preferred_element_type=jnp.float32)
         + jnp.dot(out_graph, w(17), preferred_element_type=jnp.float32)
         + w(18))
    h = _elu(h)
    # last layer uses the zero-column-padded weight/bias -> [S, W] output;
    # the n_label slice happens outside the kernel (lane-padded store).
    o_ref[...] = jnp.dot(h, w_pad(19), preferred_element_type=jnp.float32) + w_pad(20)


# ----------------------------------------------------------------------------
# pallas_call wrapper (single launch, everything resident in VMEM)
# ----------------------------------------------------------------------------
_VMEM = functools.partial(pl.BlockSpec, memory_space=pltpu.MemorySpace.VMEM)


@functools.partial(jax.jit, static_argnames=("layout", "num_segments", "n_label"))
def samplenet_forward(w_slab, graph_out, gidx, nseg, sseg, inv_cnt,
                      sample_node_feature, sample_feature,
                      *, layout, num_segments, n_label):
    S = num_segments
    G, Fn = graph_out.shape
    N, Fin = sample_node_feature.shape
    M, Fs = sample_feature.shape
    Wp = w_slab.shape[1]
    E = layout[0][2]  # nn first-layer output width = embedding_size

    # Advisory cost hint so XLA can schedule surrounding ops around this tiny call.
    flops = 2 * (N * Fin * E + N * E * Fn          # nn
                 + N * G * Fn                      # one-hot gather matmul
                 + N * Fn * E + N * E * E          # modal1
                 + S * N * E                       # segment-sum matmul
                 + S * Fn * E + S * E * E          # modal2
                 + S * M * Fs                      # segment-mean matmul
                 + S * Fs * E + S * E * E          # feature modal
                 + 2 * S * E * E + S * E * Wp)     # nn_out (split + padded last layer)
    transcendentals = 2 * N * E + 3 * S * E        # five ELUs (upper bound)
    bytes_accessed = 4 * (int(w_slab.size) + G * Fn + N * Fin + M * Fs
                          + S * Wp + 2 * N + M + S)

    flat = (gidx, nseg, sseg, inv_cnt, graph_out,
            sample_node_feature, sample_feature, w_slab)

    # TODO(synk): at realistic N/G add a row grid over N (block (TM, F), constant
    # weight index_maps so the slab stays VMEM-resident, accumulator + pl.when for
    # the segment-sum, dimension_semantics=("parallel",) so v7x's 2 TensorCores
    # split the work), replace the O(N*G)/O(S*N) one-hots with scalar-prefetch
    # pl.Element row gathers, and budget TM against v7x's 64 MiB VMEM.
    out_pad = pl.pallas_call(
        functools.partial(_fused_forward_kernel, layout=layout),
        out_shape=jax.ShapeDtypeStruct((S, Wp), jnp.float32),
        in_specs=[_VMEM()] * len(flat),
        out_specs=_VMEM(),
        compiler_params=pltpu.CompilerParams(vmem_limit_bytes=32 * 1024 * 1024),
        cost_estimate=pl.CostEstimate(flops=flops,
                                      transcendentals=transcendentals,
                                      bytes_accessed=bytes_accessed),
    )(*flat)
    return out_pad[:, :n_label]


# ----------------------------------------------------------------------------
# Parameters, packing, module wrapper
# ----------------------------------------------------------------------------
def _init_linear(key, in_f, out_f):
    # PyTorch nn.Linear default init: U(-1/sqrt(in), 1/sqrt(in)) for W and b.
    k1, k2 = jax.random.split(key)
    bound = 1.0 / np.sqrt(in_f)
    w_t = jax.random.uniform(k1, (in_f, out_f), jnp.float32, -bound, bound)
    b = jax.random.uniform(k2, (1, out_f), jnp.float32, -bound, bound)
    return w_t, b


def _init_mlp2(key, in_f, hidden, out_f):
    k1, k2 = jax.random.split(key)
    w1, b1 = _init_linear(k1, in_f, hidden)
    w2, b2 = _init_linear(k2, hidden, out_f)
    return (w1, b1, w2, b2)


def _pack_weights(params):
    """Pack all 21 weight/bias tensors into ONE contiguous f32 slab.

    Each tensor's rows are padded to a multiple of 8 (sublane tile) and columns
    to the common lane width; static (offset, rows, cols) triples let the kernel
    recover each matrix with a zero-cost ref slice.  One DMA instead of 21.
    """
    order = (*params["nn"], *params["modal1"], *params["modal2"],
             *params["feature_modal"], *params["out"])
    width = max(int(t.shape[1]) for t in order)
    blocks, layout, off = [], [], 0
    for t in order:
        r, c = int(t.shape[0]), int(t.shape[1])
        rp = -(-r // 8) * 8
        blk = jnp.zeros((rp, width), jnp.float32).at[:r, :c].set(
            t.astype(jnp.float32))
        blocks.append(blk)
        layout.append((off, r, c))
        off += rp
    return jnp.concatenate(blocks, axis=0), tuple(layout)


class SampleNetPallas:
    def __init__(self, num_input_feature, num_sample_feature, num_node_feature,
                 n_label, embedding_size=32, key=jax.random.PRNGKey(42)):
        # torch SampleNet builds nn_graph_modal2 = Linear(num_node_feature, E) and
        # applies it to the (E-wide) scattered modal1 output, so its forward is
        # only shape-consistent when num_node_feature == embedding_size.
        assert num_node_feature == embedding_size, (
            "SampleNet.forward requires num_node_feature == embedding_size")
        ks = jax.random.split(key, 5)
        E = embedding_size
        nn_p = _init_mlp2(ks[0], num_input_feature, E, num_node_feature)
        m1_p = _init_mlp2(ks[1], num_node_feature, E, E)
        m2_p = _init_mlp2(ks[2], num_node_feature, E, E)
        fm_p = _init_mlp2(ks[3], num_sample_feature, E, E)
        o_w1, o_b1, o_w2, o_b2 = _init_mlp2(ks[4], 2 * E, E, n_label)
        # Split nn_out's first-layer weight so the kernel skips the concat:
        # h = out_feature @ W1[:E] + out_graph @ W1[E:] + b1  (identical math).
        out_p = (o_w1[:E], o_w1[E:], o_b1, o_w2, o_b2)
        self.params = dict(nn=nn_p, modal1=m1_p, modal2=m2_p,
                           feature_modal=fm_p, out=out_p)
        self.n_label = n_label
        # One-time: pack all weights/biases into a single HBM->VMEM slab.
        # TODO(synk): store a bf16 slab for v6e/v7x (halved DMA bytes, 2x MXU rate)
        # keeping f32 accumulation + f32 ELU on v5e; kept f32 here for exactness.
        self.w_slab, self.layout = _pack_weights(self.params)

    @staticmethod
    def preprocess_ids(sample_node_id, sample_id, num_graph_rows=None):
        """Host-side id compaction, run ONCE per id layout (not per forward).

        Equivalent to torch `scatter(x, ids); x.index_select(0, ids.unique())`:
        unique() is sorted, so rank-remapped (compact) segment ids give the same
        row ordering.  Also precomputes the segment-mean 1/count vector.
        """
        # TODO(synk): np.unique-based compaction has no static-shape in-kernel
        # equivalent; it stays on the host (one-time cost).
        node_seg = np.asarray(sample_node_id)[:, 0]
        gather_idx = np.asarray(sample_node_id)[:, 1].astype(np.int32)
        samp_seg = np.asarray(sample_id)
        uniq_node, node_compact = np.unique(node_seg, return_inverse=True)
        uniq_samp, samp_compact = np.unique(samp_seg, return_inverse=True)
        assert np.array_equal(uniq_node, uniq_samp), (
            "sample_node_id[:,0] and sample_id must index the same sample set; "
            "otherwise torch cat() silently misaligns out_feature/out_graph rows")
        if num_graph_rows is not None:
            assert int(gather_idx.max()) < int(num_graph_rows), (
                "gather index out of range of graph_out")
        num_segments = int(len(uniq_node))
        counts = np.bincount(samp_compact, minlength=num_segments).astype(np.float32)
        inv_cnt = 1.0 / np.maximum(counts, 1.0)
        return (jnp.asarray(gather_idx, jnp.int32)[:, None],           # [N,1]
                jnp.asarray(node_compact.astype(np.int32))[None, :],   # [1,N]
                jnp.asarray(samp_compact.astype(np.int32))[None, :],   # [1,M]
                jnp.asarray(inv_cnt, jnp.float32)[:, None],            # [S,1]
                num_segments)

    def apply(self, graph_out, gidx, nseg, sseg, inv_cnt,
              sample_node_feature, sample_feature, num_segments):
        return samplenet_forward(self.w_slab, graph_out, gidx, nseg, sseg, inv_cnt,
                                 sample_node_feature, sample_feature,
                                 layout=self.layout, num_segments=num_segments,
                                 n_label=self.n_label)

    def __call__(self, graph_out, sample_node_id, sample_node_feature,
                 sample_id, sample_feature):
        # Convenience path mirroring the torch signature; hot loops should call
        # preprocess_ids() once and then apply() (fully jitted, no host sync).
        gidx, nseg, sseg, inv_cnt, num_seg = self.preprocess_ids(
            sample_node_id, sample_id, num_graph_rows=graph_out.shape[0])
        return self.apply(graph_out, gidx, nseg, sseg, inv_cnt,
                          sample_node_feature, sample_feature, num_seg)


# ----------------------------------------------------------------------------
# Pure-JAX reference (sanity check)
# ----------------------------------------------------------------------------
def _ref_mlp2(x, p):
    w1, b1, w2, b2 = p
    h = jnp.dot(x, w1, precision=lax.Precision.HIGHEST) + b1
    h = jnp.where(h > 0, h, jnp.exp(h) - 1.0)
    return jnp.dot(h, w2, precision=lax.Precision.HIGHEST) + b2


def _ref_forward(params, graph_out, sample_node_id, sample_node_feature,
                 sample_id, sample_feature):
    node_seg = np.asarray(sample_node_id)[:, 0]
    samp_seg = np.asarray(sample_id)
    _, node_c = np.unique(node_seg, return_inverse=True)
    _, samp_c = np.unique(samp_seg, return_inverse=True)
    S = int(node_c.max()) + 1
    s_feature = _ref_mlp2(sample_node_feature, params["nn"])
    g_feature = graph_out[np.asarray(sample_node_id)[:, 1]]
    x = _ref_mlp2(s_feature + g_feature, params["modal1"])
    x = jax.ops.segment_sum(x, jnp.asarray(node_c), num_segments=S)
    out_graph = _ref_mlp2(x, params["modal2"])
    sums = jax.ops.segment_sum(sample_feature, jnp.asarray(samp_c), num_segments=S)
    cnts = jax.ops.segment_sum(jnp.ones((sample_feature.shape[0],)),
                               jnp.asarray(samp_c), num_segments=S)[:, None]
    out_feature = _ref_mlp2(sums / jnp.maximum(cnts, 1.0), params["feature_modal"])
    w1f, w1g, b1, w2, b2 = params["out"]
    out = jnp.concatenate([out_feature, out_graph], axis=-1)
    w1 = jnp.concatenate([w1f, w1g], axis=0)
    return _ref_mlp2(out, (w1, b1, w2, b2))


# ----------------------------------------------------------------------------
if __name__ == "__main__":
    NUM_INPUT_FEATURE = 16
    NUM_SAMPLE_FEATURE = 8
    NUM_NODE_FEATURE = 32   # must equal embedding_size (see torch spec note)
    N_LABEL = 4
    EMBEDDING = 32

    G = 12   # rows of graph_out
    N = 24   # sample-node rows
    S = 6    # distinct samples
    M = 18   # sample-feature rows

    key = jax.random.PRNGKey(0)
    k1, k2, k3 = jax.random.split(key, 3)

    graph_out = jax.random.normal(k1, (G, NUM_NODE_FEATURE), jnp.float32)
    sample_node_feature = jax.random.normal(k2, (N, NUM_INPUT_FEATURE), jnp.float32)
    sample_feature = jax.random.normal(k3, (M, NUM_SAMPLE_FEATURE), jnp.float32)

    # sample_node_id[:, 0] -> which sample each node row belongs to (covers 0..S-1)
    # sample_node_id[:, 1] -> which graph_out row to gather
    node_to_sample = np.repeat(np.arange(S, dtype=np.int32), N // S)
    node_to_graph = (np.arange(N, dtype=np.int32) * 5) % G
    sample_node_id = jnp.asarray(np.stack([node_to_sample, node_to_graph], axis=1))
    sample_id = jnp.asarray(np.repeat(np.arange(S, dtype=np.int32), M // S))

    net = SampleNetPallas(NUM_INPUT_FEATURE, NUM_SAMPLE_FEATURE,
                          NUM_NODE_FEATURE, N_LABEL, EMBEDDING,
                          key=jax.random.PRNGKey(42))

    # id bookkeeping: done ONCE on the host, outside the jitted hot path
    gidx, nseg, sseg, inv_cnt, num_seg = net.preprocess_ids(
        sample_node_id, sample_id, num_graph_rows=G)

    out = net.apply(graph_out, gidx, nseg, sseg, inv_cnt,
                    sample_node_feature, sample_feature, num_seg)
    out = jax.block_until_ready(out)
    assert out.shape == (S, N_LABEL), out.shape

    ref = jax.block_until_ready(
        _ref_forward(net.params, graph_out, sample_node_id, sample_node_feature,
                     sample_id, sample_feature))
    np.testing.assert_allclose(np.asarray(out), np.asarray(ref),
                               rtol=1e-2, atol=1e-2)

    print("KERNEL_OK")
</pallas_src>

<mosaic_0001>
module attributes {stable_mosaic.version = 11 : i64} {
  func.func @_fused_forward_kernel(%arg0: memref<24x1xi32, #tpu.memory_space<vmem>>, %arg1: memref<1x24xi32, #tpu.memory_space<vmem>>, %arg2: memref<1x18xi32, #tpu.memory_space<vmem>>, %arg3: memref<6x1xf32, #tpu.memory_space<vmem>>, %arg4: memref<12x32xf32, #tpu.memory_space<vmem>>, %arg5: memref<24x16xf32, #tpu.memory_space<vmem>>, %arg6: memref<18x8xf32, #tpu.memory_space<vmem>>, %arg7: memref<392x32xf32, #tpu.memory_space<vmem>>, %arg8: memref<6x32xf32, #tpu.memory_space<vmem>>) attributes {dimension_semantics = [], scalar_prefetch = 0 : i64, scratch_operands = 0 : i64, tpu.core_type = #tpu.core_type<tc>} {
    %c0 = arith.constant 0 : index
    %c0_0 = arith.constant 0 : index
    %0 = vector.load %arg5[%c0, %c0_0] : memref<24x16xf32, #tpu.memory_space<vmem>>, vector<24x16xf32>
    %c0_1 = arith.constant 0 : index
    %c0_2 = arith.constant 0 : index
    %1 = vector.load %arg7[%c0_1, %c0_2] : memref<392x32xf32, #tpu.memory_space<vmem>>, vector<16x32xf32>
    %c16 = arith.constant 16 : index
    %c0_3 = arith.constant 0 : index
    %2 = vector.load %arg7[%c16, %c0_3] : memref<392x32xf32, #tpu.memory_space<vmem>>, vector<1x32xf32>
    %c24 = arith.constant 24 : index
    %c0_4 = arith.constant 0 : index
    %3 = vector.load %arg7[%c24, %c0_4] : memref<392x32xf32, #tpu.memory_space<vmem>>, vector<32x32xf32>
    %c56 = arith.constant 56 : index
    %c0_5 = arith.constant 0 : index
    %4 = vector.load %arg7[%c56, %c0_5] : memref<392x32xf32, #tpu.memory_space<vmem>>, vector<1x32xf32>
    %cst = arith.constant dense<0.000000e+00> : vector<24x32xf32>
    %5 = tpu.matmul %0, %1, %cst {dimension_numbers = #tpu.dot_dimension_numbers<[1], [0], [0], [1], [0, 0, 1, 1], [], []>} : vector<24x16xf32>, vector<16x32xf32>, vector<24x32xf32> -> vector<24x32xf32>
    %6 = vector.broadcast %2 : vector<1x32xf32> to vector<24x32xf32>
    %7 = arith.addf %5, %6 : vector<24x32xf32>
    %cst_6 = arith.constant 0.000000e+00 : f32
    %8 = vector.broadcast %cst_6 : f32 to vector<24x32xf32>
    %9 = arith.cmpf ogt, %7, %8 : vector<24x32xf32>
    %10 = math.exp %7 : vector<24x32xf32>
    %cst_7 = arith.constant 1.000000e+00 : f32
    %11 = vector.broadcast %cst_7 : f32 to vector<24x32xf32>
    %12 = arith.subf %10, %11 : vector<24x32xf32>
    %13 = arith.select %9, %7, %12 : vector<24x32xi1>, vector<24x32xf32>
    %cst_8 = arith.constant dense<0.000000e+00> : vector<24x32xf32>
    %14 = tpu.matmul %13, %3, %cst_8 {dimension_numbers = #tpu.dot_dimension_numbers<[1], [0], [0], [1], [0, 0, 1, 1], [], []>} : vector<24x32xf32>, vector<32x32xf32>, vector<24x32xf32> -> vector<24x32xf32>
    %15 = vector.broadcast %4 : vector<1x32xf32> to vector<24x32xf32>
    %16 = arith.addf %14, %15 : vector<24x32xf32>
    %17 = tpu.iota {dimensions = array<i32: 1>} : vector<24x12xi32>
    %c0_9 = arith.constant 0 : index
    %c0_10 = arith.constant 0 : index
    %18 = vector.load %arg0[%c0_9, %c0_10] : memref<24x1xi32, #tpu.memory_space<vmem>>, vector<24x1xi32>
    %19 = vector.broadcast %18 : vector<24x1xi32> to vector<24x12xi32>
    %20 = arith.cmpi eq, %17, %19 : vector<24x12xi32>
    %21 = arith.extui %20 : vector<24x12xi1> to vector<24x12xi32>
    %22 = arith.sitofp %21 : vector<24x12xi32> to vector<24x12xf32>
    %c0_11 = arith.constant 0 : index
    %c0_12 = arith.constant 0 : index
    %23 = vector.load %arg4[%c0_11, %c0_12] : memref<12x32xf32, #tpu.memory_space<vmem>>, vector<12x32xf32>
    %cst_13 = arith.constant dense<0.000000e+00> : vector<24x32xf32>
    %24 = tpu.matmul %22, %23, %cst_13 {dimension_numbers = #tpu.dot_dimension_numbers<[1], [0], [0], [1], [0, 0, 1, 1], [], []>} : vector<24x12xf32>, vector<12x32xf32>, vector<24x32xf32> -> vector<24x32xf32>
    %25 = arith.addf %16, %24 : vector<24x32xf32>
    %c64 = arith.constant 64 : index
    %c0_14 = arith.constant 0 : index
    %26 = vector.load %arg7[%c64, %c0_14] : memref<392x32xf32, #tpu.memory_space<vmem>>, vector<32x32xf32>
    %c96 = arith.constant 96 : index
    %c0_15 = arith.constant 0 : index
    %27 = vector.load %arg7[%c96, %c0_15] : memref<392x32xf32, #tpu.memory_space<vmem>>, vector<1x32xf32>
    %c104 = arith.constant 104 : index
    %c0_16 = arith.constant 0 : index
    %28 = vector.load %arg7[%c104, %c0_16] : memref<392x32xf32, #tpu.memory_space<vmem>>, vector<32x32xf32>
    %c136 = arith.constant 136 : index
    %c0_17 = arith.constant 0 : index
    %29 = vector.load %arg7[%c136, %c0_17] : memref<392x32xf32, #tpu.memory_space<vmem>>, vector<1x32xf32>
    %cst_18 = arith.constant dense<0.000000e+00> : vector<24x32xf32>
    %30 = tpu.matmul %25, %26, %cst_18 {dimension_numbers = #tpu.dot_dimension_numbers<[1], [0], [0], [1], [0, 0, 1, 1], [], []>} : vector<24x32xf32>, vector<32x32xf32>, vector<24x32xf32> -> vector<24x32xf32>
    %31 = vector.broadcast %27 : vector<1x32xf32> to vector<24x32xf32>
    %32 = arith.addf %30, %31 : vector<24x32xf32>
    %cst_19 = arith.constant 0.000000e+00 : f32
    %33 = vector.broadcast %cst_19 : f32 to vector<24x32xf32>
    %34 = arith.cmpf ogt, %32, %33 : vector<24x32xf32>
    %35 = math.exp %32 : vector<24x32xf32>
    %cst_20 = arith.constant 1.000000e+00 : f32
    %36 = vector.broadcast %cst_20 : f32 to vector<24x32xf32>
    %37 = arith.subf %35, %36 : vector<24x32xf32>
    %38 = arith.select %34, %32, %37 : vector<24x32xi1>, vector<24x32xf32>
    %cst_21 = arith.constant dense<0.000000e+00> : vector<24x32xf32>
    %39 = tpu.matmul %38, %28, %cst_21 {dimension_numbers = #tpu.dot_dimension_numbers<[1], [0], [0], [1], [0, 0, 1, 1], [], []>} : vector<24x32xf32>, vector<32x32xf32>, vector<24x32xf32> -> vector<24x32xf32>
    %40 = vector.broadcast %29 : vector<1x32xf32> to vector<24x32xf32>
    %41 = arith.addf %39, %40 : vector<24x32xf32>
    %42 = tpu.iota {dimensions = array<i32: 0>} : vector<6x24xi32>
    %c0_22 = arith.constant 0 : index
    %c0_23 = arith.constant 0 : index
    %43 = vector.load %arg1[%c0_22, %c0_23] : memref<1x24xi32, #tpu.memory_space<vmem>>, vector<1x24xi32>
    %44 = vector.broadcast %43 : vector<1x24xi32> to vector<6x24xi32>
    %45 = arith.cmpi eq, %42, %44 : vector<6x24xi32>
    %46 = arith.extui %45 : vector<6x24xi1> to vector<6x24xi32>
    %47 = arith.sitofp %46 : vector<6x24xi32> to vector<6x24xf32>
    %cst_24 = arith.constant dense<0.000000e+00> : vector<6x32xf32>
    %48 = tpu.matmul %47, %41, %cst_24 {dimension_numbers = #tpu.dot_dimension_numbers<[1], [0], [0], [1], [0, 0, 1, 1], [], []>} : vector<6x24xf32>, vector<24x32xf32>, vector<6x32xf32> -> vector<6x32xf32>
    %c144 = arith.constant 144 : index
    %c0_25 = arith.constant 0 : index
    %49 = vector.load %arg7[%c144, %c0_25] : memref<392x32xf32, #tpu.memory_space<vmem>>, vector<32x32xf32>
    %c176 = arith.constant 176 : index
    %c0_26 = arith.constant 0 : index
    %50 = vector.load %arg7[%c176, %c0_26] : memref<392x32xf32, #tpu.memory_space<vmem>>, vector<1x32xf32>
    %c184 = arith.constant 184 : index
    %c0_27 = arith.constant 0 : index
    %51 = vector.load %arg7[%c184, %c0_27] : memref<392x32xf32, #tpu.memory_space<vmem>>, vector<32x32xf32>
    %c216 = arith.constant 216 : index
    %c0_28 = arith.constant 0 : index
    %52 = vector.load %arg7[%c216, %c0_28] : memref<392x32xf32, #tpu.memory_space<vmem>>, vector<1x32xf32>
    %cst_29 = arith.constant dense<0.000000e+00> : vector<6x32xf32>
    %53 = tpu.matmul %48, %49, %cst_29 {dimension_numbers = #tpu.dot_dimension_numbers<[1], [0], [0], [1], [0, 0, 1, 1], [], []>} : vector<6x32xf32>, vector<32x32xf32>, vector<6x32xf32> -> vector<6x32xf32>
    %54 = vector.broadcast %50 : vector<1x32xf32> to vector<6x32xf32>
    %55 = arith.addf %53, %54 : vector<6x32xf32>
    %cst_30 = arith.constant 0.000000e+00 : f32
    %56 = vector.broadcast %cst_30 : f32 to vector<6x32xf32>
    %57 = arith.cmpf ogt, %55, %56 : vector<6x32xf32>
    %58 = math.exp %55 : vector<6x32xf32>
    %cst_31 = arith.constant 1.000000e+00 : f32
    %59 = vector.broadcast %cst_31 : f32 to vector<6x32xf32>
    %60 = arith.subf %58, %59 : vector<6x32xf32>
    %61 = arith.select %57, %55, %60 : vector<6x32xi1>, vector<6x32xf32>
    %cst_32 = arith.constant dense<0.000000e+00> : vector<6x32xf32>
    %62 = tpu.matmul %61, %51, %cst_32 {dimension_numbers = #tpu.dot_dimension_numbers<[1], [0], [0], [1], [0, 0, 1, 1], [], []>} : vector<6x32xf32>, vector<32x32xf32>, vector<6x32xf32> -> vector<6x32xf32>
    %63 = vector.broadcast %52 : vector<1x32xf32> to vector<6x32xf32>
    %64 = arith.addf %62, %63 : vector<6x32xf32>
    %65 = tpu.iota {dimensions = array<i32: 0>} : vector<6x18xi32>
    %c0_33 = arith.constant 0 : index
    %c0_34 = arith.constant 0 : index
    %66 = vector.load %arg2[%c0_33, %c0_34] : memref<1x18xi32, #tpu.memory_space<vmem>>, vector<1x18xi32>
    %67 = vector.broadcast %66 : vector<1x18xi32> to vector<6x18xi32>
    %68 = arith.cmpi eq, %65, %67 : vector<6x18xi32>
    %69 = arith.extui %68 : vector<6x18xi1> to vector<6x18xi32>
    %70 = arith.sitofp %69 : vector<6x18xi32> to vector<6x18xf32>
    %c0_35 = arith.constant 0 : index
    %c0_36 = arith.constant 0 : index
    %71 = vector.load %arg6[%c0_35, %c0_36] : memref<18x8xf32, #tpu.memory_space<vmem>>, vector<18x8xf32>
    %cst_37 = arith.constant dense<0.000000e+00> : vector<6x8xf32>
    %72 = tpu.matmul %70, %71, %cst_37 {dimension_numbers = #tpu.dot_dimension_numbers<[1], [0], [0], [1], [0, 0, 1, 1], [], []>} : vector<6x18xf32>, vector<18x8xf32>, vector<6x8xf32> -> vector<6x8xf32>
    %c0_38 = arith.constant 0 : index
    %c0_39 = arith.constant 0 : index
    %73 = vector.load %arg3[%c0_38, %c0_39] : memref<6x1xf32, #tpu.memory_space<vmem>>, vector<6x1xf32>
    %74 = vector.broadcast %73 : vector<6x1xf32> to vector<6x8xf32>
    %75 = arith.mulf %72, %74 : vector<6x8xf32>
    %c224 = arith.constant 224 : index
    %c0_40 = arith.constant 0 : index
    %76 = vector.load %arg7[%c224, %c0_40] : memref<392x32xf32, #tpu.memory_space<vmem>>, vector<8x32xf32>
    %c232 = arith.constant 232 : index
    %c0_41 = arith.constant 0 : index
    %77 = vector.load %arg7[%c232, %c0_41] : memref<392x32xf32, #tpu.memory_space<vmem>>, vector<1x32xf32>
    %c240 = arith.constant 240 : index
    %c0_42 = arith.constant 0 : index
    %78 = vector.load %arg7[%c240, %c0_42] : memref<392x32xf32, #tpu.memory_space<vmem>>, vector<32x32xf32>
    %c272 = arith.constant 272 : index
    %c0_43 = arith.constant 0 : index
    %79 = vector.load %arg7[%c272, %c0_43] : memref<392x32xf32, #tpu.memory_space<vmem>>, vector<1x32xf32>
    %cst_44 = arith.constant dense<0.000000e+00> : vector<6x32xf32>
    %80 = tpu.matmul %75, %76, %cst_44 {dimension_numbers = #tpu.dot_dimension_numbers<[1], [0], [0], [1], [0, 0, 1, 1], [], []>} : vector<6x8xf32>, vector<8x32xf32>, vector<6x32xf32> -> vector<6x32xf32>
    %81 = vector.broadcast %77 : vector<1x32xf32> to vector<6x32xf32>
    %82 = arith.addf %80, %81 : vector<6x32xf32>
    %cst_45 = arith.constant 0.000000e+00 : f32
    %83 = vector.broadcast %cst_45 : f32 to vector<6x32xf32>
    %84 = arith.cmpf ogt, %82, %83 : vector<6x32xf32>
    %85 = math.exp %82 : vector<6x32xf32>
    %cst_46 = arith.constant 1.000000e+00 : f32
    %86 = vector.broadcast %cst_46 : f32 to vector<6x32xf32>
    %87 = arith.subf %85, %86 : vector<6x32xf32>
    %88 = arith.select %84, %82, %87 : vector<6x32xi1>, vector<6x32xf32>
    %cst_47 = arith.constant dense<0.000000e+00> : vector<6x32xf32>
    %89 = tpu.matmul %88, %78, %cst_47 {dimension_numbers = #tpu.dot_dimension_numbers<[1], [0], [0], [1], [0, 0, 1, 1], [], []>} : vector<6x32xf32>, vector<32x32xf32>, vector<6x32xf32> -> vector<6x32xf32>
    %90 = vector.broadcast %79 : vector<1x32xf32> to vector<6x32xf32>
    %91 = arith.addf %89, %90 : vector<6x32xf32>
    %c280 = arith.constant 280 : index
    %c0_48 = arith.constant 0 : index
    %92 = vector.load %arg7[%c280, %c0_48] : memref<392x32xf32, #tpu.memory_space<vmem>>, vector<32x32xf32>
    %cst_49 = arith.constant dense<0.000000e+00> : vector<6x32xf32>
    %93 = tpu.matmul %91, %92, %cst_49 {dimension_numbers = #tpu.dot_dimension_numbers<[1], [0], [0], [1], [0, 0, 1, 1], [], []>} : vector<6x32xf32>, vector<32x32xf32>, vector<6x32xf32> -> vector<6x32xf32>
    %c312 = arith.constant 312 : index
    %c0_50 = arith.constant 0 : index
    %94 = vector.load %arg7[%c312, %c0_50] : memref<392x32xf32, #tpu.memory_space<vmem>>, vector<32x32xf32>
    %cst_51 = arith.constant dense<0.000000e+00> : vector<6x32xf32>
    %95 = tpu.matmul %64, %94, %cst_51 {dimension_numbers = #tpu.dot_dimension_numbers<[1], [0], [0], [1], [0, 0, 1, 1], [], []>} : vector<6x32xf32>, vector<32x32xf32>, vector<6x32xf32> -> vector<6x32xf32>
    %96 = arith.addf %93, %95 : vector<6x32xf32>
    %c344 = arith.constant 344 : index
    %c0_52 = arith.constant 0 : index
    %97 = vector.load %arg7[%c344, %c0_52] : memref<392x32xf32, #tpu.memory_space<vmem>>, vector<1x32xf32>
    %98 = vector.broadcast %97 : vector<1x32xf32> to vector<6x32xf32>
    %99 = arith.addf %96, %98 : vector<6x32xf32>
    %cst_53 = arith.constant 0.000000e+00 : f32
    %100 = vector.broadcast %cst_53 : f32 to vector<6x32xf32>
    %101 = arith.cmpf ogt, %99, %100 : vector<6x32xf32>
    %102 = math.exp %99 : vector<6x32xf32>
    %cst_54 = arith.constant 1.000000e+00 : f32
    %103 = vector.broadcast %cst_54 : f32 to vector<6x32xf32>
    %104 = arith.subf %102, %103 : vector<6x32xf32>
    %105 = arith.select %101, %99, %104 : vector<6x32xi1>, vector<6x32xf32>
    %c352 = arith.constant 352 : index
    %c0_55 = arith.constant 0 : index
    %106 = vector.load %arg7[%c352, %c0_55] : memref<392x32xf32, #tpu.memory_space<vmem>>, vector<32x32xf32>
    %cst_56 = arith.constant dense<0.000000e+00> : vector<6x32xf32>
    %107 = tpu.matmul %105, %106, %cst_56 {dimension_numbers = #tpu.dot_dimension_numbers<[1], [0], [0], [1], [0, 0, 1, 1], [], []>} : vector<6x32xf32>, vector<32x32xf32>, vector<6x32xf32> -> vector<6x32xf32>
    %c384 = arith.constant 384 : index
    %c0_57 = arith.constant 0 : index
    %108 = vector.load %arg7[%c384, %c0_57] : memref<392x32xf32, #tpu.memory_space<vmem>>, vector<1x32xf32>
    %109 = vector.broadcast %108 : vector<1x32xf32> to vector<6x32xf32>
    %110 = arith.addf %107, %109 : vector<6x32xf32>
    %c0_58 = arith.constant 0 : index
    %c0_59 = arith.constant 0 : index
    %111 = vector.load %arg8[%c0_58, %c0_59] : memref<6x32xf32, #tpu.memory_space<vmem>>, vector<6x32xf32>
    tpu.vector_store %arg8[%c0_58, %c0_59], %110 {strides = array<i32>} : memref<6x32xf32, #tpu.memory_space<vmem>>, vector<6x32xf32>,
    return
  }
}

</mosaic_0001>

<llo_original>
// kernel: samplenet_forward.1
$region0: #{samplenet_forward.1}
  #allocation0 [shape = 'u32[]', space=smem, size = 0x4, offset = 0x4, fixed_abs, tag = 'smem constant byte address 0x4 - core index']
  #allocation1 [shape = 'u32[144,128]{1,0:T(1,128)}', space=vmem, size = 0x12000, scoped, tag = 'internal scratch']
  %s0 = inlined_call_operand.vmem [shape: s32[24,1], index: 0, kind: input, shape index: {}]
  %s1 = inlined_call_operand.vmem [shape: s32[1,24], index: 1, kind: input, shape index: {}]
  %s2 = inlined_call_operand.vmem [shape: s32[1,18], index: 2, kind: input, shape index: {}]
  %s3 = inlined_call_operand.vmem [shape: f32[6,1], index: 3, kind: input, shape index: {}]
  %s4 = inlined_call_operand.vmem [shape: f32[12,32], index: 4, kind: input, shape index: {}]
  %s5 = inlined_call_operand.vmem [shape: f32[24,16], index: 5, kind: input, shape index: {}]
  %s6 = inlined_call_operand.vmem [shape: f32[18,8], index: 6, kind: input, shape index: {}]
  %s7 = inlined_call_operand.vmem [shape: f32[392,32], index: 7, kind: input, shape index: {}]
  %s8 = inlined_call_operand.vmem [shape: f32[6,32], index: 8, kind: output, shape index: {}]
  %s9 = sld [smem:[#allocation0]]
  $region42: #{samplenet_forward.1} parent=0
    _
  %s11 = ssub.s32 1, %s9
  %s12 = scalar_select 0, %s11, %s9
  // Predicated region
  $region2: #{samplenet_forward.1} parent=0 // pred_check
    _
  $region3: #{samplenet_forward.1} parent=0 // pred_check_branch
    %14 = sbr.rel (0) target = $region5
  $region4: #{samplenet_forward.1} parent=0 // pred_region
    _
  $region5: #{samplenet_forward.1} parent=0 // pred_fallthru
    _
  // Predicated region
  $region6: #{samplenet_forward.1} parent=0 // pred_check
    _
  $region7: #{samplenet_forward.1} parent=0 // pred_check_branch
    %16 = sbr.rel (0) target = $region9
  $region8: #{samplenet_forward.1} parent=0 // pred_region
    _
  $region9: #{samplenet_forward.1} parent=0 // pred_fallthru
    _
  // Predicated region
  $region10: #{samplenet_forward.1} parent=0 // pred_check
    _
  $region11: #{samplenet_forward.1} parent=0 // pred_check_branch
    %18 = sbr.rel (0) target = $region13
  $region12: #{samplenet_forward.1} parent=0 // pred_region
    _
  $region13: #{samplenet_forward.1} parent=0 // pred_fallthru
    _
  // Predicated region
  $region14: #{samplenet_forward.1} parent=0 // pred_check
    _
  $region15: #{samplenet_forward.1} parent=0 // pred_check_branch
    %20 = sbr.rel (0) target = $region17
  $region16: #{samplenet_forward.1} parent=0 // pred_region
    _
  $region17: #{samplenet_forward.1} parent=0 // pred_fallthru
    _
  // Predicated region
  $region18: #{samplenet_forward.1} parent=0 // pred_check
    _
  $region19: #{samplenet_forward.1} parent=0 // pred_check_branch
    %22 = sbr.rel (0) target = $region21
  $region20: #{samplenet_forward.1} parent=0 // pred_region
    _
  $region21: #{samplenet_forward.1} parent=0 // pred_fallthru
    _
  // Predicated region
  $region22: #{samplenet_forward.1} parent=0 // pred_check
    _
  $region23: #{samplenet_forward.1} parent=0 // pred_check_branch
    %24 = sbr.rel (0) target = $region25
  $region24: #{samplenet_forward.1} parent=0 // pred_region
    _
  $region25: #{samplenet_forward.1} parent=0 // pred_fallthru
    _
  // Predicated region
  $region26: #{samplenet_forward.1} parent=0 // pred_check
    _
  $region27: #{samplenet_forward.1} parent=0 // pred_check_branch
    %26 = sbr.rel (0) target = $region29
  $region28: #{samplenet_forward.1} parent=0 // pred_region
    _
  $region29: #{samplenet_forward.1} parent=0 // pred_fallthru
    _
  // Predicated region
  $region30: #{samplenet_forward.1} parent=0 // pred_check
    _
  $region31: #{samplenet_forward.1} parent=0 // pred_check_branch
    %28 = sbr.rel (0) target = $region33
  $region32: #{samplenet_forward.1} parent=0 // pred_region
    _
  $region33: #{samplenet_forward.1} parent=0 // pred_fallthru
    _
  %v29 = vld [vmem:[%s5] sm:$0xff]
  %v30 = vld [vmem:[%s5 + $0x8] sm:$0xff]
  %v31 = vld [vmem:[%s5 + $0x10] sm:$0xff]
  %v32 = vld [vmem:[%s7] sm:$0xff]
  %v33 = vld [vmem:[%s7 + $0x8] sm:$0xff]
  %v34 = vld [vmem:[%s7 + $0x10] sm:$0x1]
  %v35 = vld [vmem:[%s7 + $0x18] sm:$0xff]
  %v36 = vld [vmem:[%s7 + $0x20] sm:$0xff]
  %v37 = vld [vmem:[%s7 + $0x28] sm:$0xff]
  %v38 = vld [vmem:[%s7 + $0x30] sm:$0xff]
  %v39 = vld [vmem:[%s7 + $0x38] sm:$0x1]
  %v40 = vlaneseq
  %v41 = vshrl.u32 %v40, 7
  %v42 = vsub.s32 0, %v41
  %v43 = vrot.slane %v34, %v42
  %vm44 = vcmask 130048
  %v46 = vsel %vm44, %v29, 0
  %v49 = vsel %vm44, %v30, 0
  %v52 = vsel %vm44, %v31, 0
  %54 = vmatprep.subr.mxu0 0.0
  %55 = vmatpush1.msra.mxu0 %v32
  %56 = vmatprep.subr.mxu0 0.0
  %57 = vmatpush1.msra.mxu0 %v33
  %58 = vmatprep.subr.mxu0 0.0
  %59 = vmatpush1.msra.mxu0 0.0
  %60 = vmatprep.subr.mxu0 0.0
  %61 = vmatpush1.msra.mxu0 0.0
  %62 = vmatprep.subr.mxu0 0.0
  %63 = vmatpush1.msra.mxu0 0.0
  %64 = vmatprep.subr.mxu0 0.0
  %65 = vmatpush1.msra.mxu0 0.0
  %66 = vmatprep.subr.mxu0 0.0
  %67 = vmatpush1.msra.mxu0 0.0
  %68 = vmatprep.subr.mxu0 0.0
  %69 = vmatpush1.msra.mxu0 0.0
  %70 = vmatprep.subr.mxu0 0.0
  %71 = vmatpush1.msra.mxu0 0.0
  %72 = vmatprep.subr.mxu0 0.0
  %73 = vmatpush1.msra.mxu0 0.0
  %74 = vmatprep.subr.mxu0 0.0
  %75 = vmatpush1.msra.mxu0 0.0
  %76 = vmatprep.subr.mxu0 0.0
  %77 = vmatpush1.msra.mxu0 0.0
  %78 = vmatprep.subr.mxu0 0.0
  %79 = vmatpush1.msra.mxu0 0.0
  %80 = vmatprep.subr.mxu0 0.0
  %81 = vmatpush1.msra.mxu0 0.0
  %82 = vmatprep.subr.mxu0 0.0
  %83 = vmatpush1.msra.mxu0 0.0
  %84 = vmatprep.subr.mxu0 0.0
  %85 = vmatpush1.msra.mxu0 0.0
  %86 = vmatprep.subr.mxu0 0.0
  %87 = vmatpush1.msra.mxu0 0.0
  %88 = vmatprep.subr.mxu0 0.0
  %89 = vmatpush1.msra.mxu0 0.0
  %90 = vmatprep.subr.mxu0 0.0
  %91 = vmatpush1.msra.mxu0 0.0
  %92 = vmatprep.subr.mxu0 0.0
  %93 = vmatpush1.msra.mxu0 0.0
  %94 = vmatprep.subr.mxu0 0.0
  %95 = vmatpush1.msra.mxu0 0.0
  %96 = vmatprep.subr.mxu0 0.0
  %97 = vmatpush1.msra.mxu0 0.0
  %98 = vmatprep.subr.mxu0 0.0
  %99 = vmatpush1.msra.mxu0 0.0
  %100 = vmatprep.subr.mxu0 0.0
  %101 = vmatpush1.msra.mxu0 0.0
  %102 = vmatprep.subr.mxu0 0.0
  %103 = vmatpush1.msra.mxu0 0.0
  %104 = vmatprep.subr.mxu0 0.0
  %105 = vmatpush1.msra.mxu0 0.0
  %106 = vmatprep.subr.mxu0 0.0
  %107 = vmatpush1.msra.mxu0 0.0
  %108 = vmatprep.subr.mxu0 0.0
  %109 = vmatpush1.msra.mxu0 0.0
  %110 = vmatprep.subr.mxu0 0.0
  %111 = vmatpush1.msra.mxu0 0.0
  %112 = vmatprep.subr.mxu0 0.0
  %113 = vmatpush1.msra.mxu0 0.0
  %114 = vmatprep.subr.mxu0 0.0
  %115 = vmatpush1.msra.mxu0 0.0
  %116 = vmatprep.subr.mxu0 0.0
  %117 = vmatpush1.msra.mxu0 0.0
  %118 = vmatprep.mubr.f32.mxu0 0.0
  %119 = vmatmul.mubr.f32.gmra.mrb[0].mxu0 %v46
  %v120 = vpop.f32.mrb[0].mxu0
  %v121 = vadd.f32 %v43, %v120
  %v122 = vpop.f32.mrb[0].mxu0
  %123 = vmatprep.mubr.f32.mxu0 0.0
  %124 = vmatmul.mubr.f32.gmra.mrb[0].mxu0 %v49
  %v125 = vpop.f32.mrb[0].mxu0
  %v126 = vadd.f32 %v43, %v125
  %v127 = vpop.f32.mrb[0].mxu0
  %128 = vmatprep.mubr.f32.mxu0 0.0
  %129 = vmatmul.mubr.f32.gmra.mrb[0].mxu0 %v52
  %v130 = vpop.f32.mrb[0].mxu0
  %v131 = vadd.f32 %v43, %v130
  %v132 = vpop.f32.mrb[0].mxu0
  %133 = vdwg.mxu0
  %vm134 = vcmp.gt.f32.partialorder %v121, 0.0
  %vm135 = vcmp.gt.f32.partialorder %v126, 0.0
  %vm136 = vcmp.gt.f32.partialorder %v131, 0.0
  %v137 = vmul.f32 %v121, 1.442695
  %v138 = vpow.pop %v137
  %v139 = vmul.f32 %v126, 1.442695
  %v140 = vpow.pop %v139
  %v141 = vmul.f32 %v131, 1.442695
  %v142 = vpow.pop %v141
  %v143 = vsub.f32 %v138, 1.0
  %v144 = vsub.f32 %v140, 1.0
  %v145 = vsub.f32 %v142, 1.0
  %v146 = vsel %vm134, %v121, %v143
  %v147 = vsel %vm135, %v126, %v144
  %v148 = vsel %vm136, %v131, %v145
  %v149 = vlaneseq
  %v150 = vshrl.u32 %v149, 7
  %v151 = vsub.s32 0, %v150
  %v152 = vrot.slane %v39, %v151
  %vm153 = vcmask 261120
  %v155 = vsel %vm153, %v146, 0
  %v158 = vsel %vm153, %v147, 0
  %v161 = vsel %vm153, %v148, 0
  %163 = vmatprep.subr.mxu0 0.0
  %164 = vmatpush1.msra.mxu0 %v35
  %165 = vmatprep.subr.mxu0 0.0
  %166 = vmatpush1.msra.mxu0 %v36
  %167 = vmatprep.subr.mxu0 0.0
  %168 = vmatpush1.msra.mxu0 %v37
  %169 = vmatprep.subr.mxu0 0.0
  %170 = vmatpush1.msra.mxu0 %v38
  %171 = vmatprep.subr.mxu0 0.0
  %172 = vmatpush1.msra.mxu0 0.0
  %173 = vmatprep.subr.mxu0 0.0
  %174 = vmatpush1.msra.mxu0 0.0
  %175 = vmatprep.subr.mxu0 0.0
  %176 = vmatpush1.msra.mxu0 0.0
  %177 = vmatprep.subr.mxu0 0.0
  %178 = vmatpush1.msra.mxu0 0.0
  %179 = vmatprep.subr.mxu0 0.0
  %180 = vmatpush1.msra.mxu0 0.0
  %181 = vmatprep.subr.mxu0 0.0
  %182 = vmatpush1.msra.mxu0 0.0
  %183 = vmatprep.subr.mxu0 0.0
  %184 = vmatpush1.msra.mxu0 0.0
  %185 = vmatprep.subr.mxu0 0.0
  %186 = vmatpush1.msra.mxu0 0.0
  %187 = vmatprep.subr.mxu0 0.0
  %188 = vmatpush1.msra.mxu0 0.0
  %189 = vmatprep.subr.mxu0 0.0
  %190 = vmatpush1.msra.mxu0 0.0
  %191 = vmatprep.subr.mxu0 0.0
  %192 = vmatpush1.msra.mxu0 0.0
  %193 = vmatprep.subr.mxu0 0.0
  %194 = vmatpush1.msra.mxu0 0.0
  %195 = vmatprep.subr.mxu0 0.0
  %196 = vmatpush1.msra.mxu0 0.0
  %197 = vmatprep.subr.mxu0 0.0
  %198 = vmatpush1.msra.mxu0 0.0
  %199 = vmatprep.subr.mxu0 0.0
  %200 = vmatpush1.msra.mxu0 0.0
  %201 = vmatprep.subr.mxu0 0.0
  %202 = vmatpush1.msra.mxu0 0.0
  %203 = vmatprep.subr.mxu0 0.0
  %204 = vmatpush1.msra.mxu0 0.0
  %205 = vmatprep.subr.mxu0 0.0
  %206 = vmatpush1.msra.mxu0 0.0
  %207 = vmatprep.subr.mxu0 0.0
  %208 = vmatpush1.msra.mxu0 0.0
  %209 = vmatprep.subr.mxu0 0.0
  %210 = vmatpush1.msra.mxu0 0.0
  %211 = vmatprep.subr.mxu0 0.0
  %212 = vmatpush1.msra.mxu0 0.0
  %213 = vmatprep.subr.mxu0 0.0
  %214 = vmatpush1.msra.mxu0 0.0
  %215 = vmatprep.subr.mxu0 0.0
  %216 = vmatpush1.msra.mxu0 0.0
  %217 = vmatprep.subr.mxu0 0.0
  %218 = vmatpush1.msra.mxu0 0.0
  %219 = vmatprep.subr.mxu0 0.0
  %220 = vmatpush1.msra.mxu0 0.0
  %221 = vmatprep.subr.mxu0 0.0
  %222 = vmatpush1.msra.mxu0 0.0
  %223 = vmatprep.subr.mxu0 0.0
  %224 = vmatpush1.msra.mxu0 0.0
  %225 = vmatprep.subr.mxu0 0.0
  %226 = vmatpush1.msra.mxu0 0.0
  %227 = vmatprep.mubr.f32.mxu0 0.0
  %228 = vmatmul.mubr.f32.gmra.mrb[0].mxu0 %v155
  %v229 = vpop.f32.mrb[0].mxu0
  %v230 = vadd.f32 %v152, %v229
  %v231 = vpop.f32.mrb[0].mxu0
  %232 = vmatprep.mubr.f32.mxu0 0.0
  %233 = vmatmul.mubr.f32.gmra.mrb[0].mxu0 %v158
  %v234 = vpop.f32.mrb[0].mxu0
  %v235 = vadd.f32 %v152, %v234
  %v236 = vpop.f32.mrb[0].mxu0
  %237 = vmatprep.mubr.f32.mxu0 0.0
  %238 = vmatmul.mubr.f32.gmra.mrb[0].mxu0 %v161
  %v239 = vpop.f32.mrb[0].mxu0
  %v240 = vadd.f32 %v152, %v239
  %v241 = vpop.f32.mrb[0].mxu0
  %242 = vdwg.mxu0
  %v243 = vlaneseq
  %v244 = vand.u32 %v243, 127
  %v245 = vld [vmem:[%s0] sm:$0xff]
  %v246 = vld [vmem:[%s0 + $0x8] sm:$0xff]
  %v247 = vld [vmem:[%s0 + $0x10] sm:$0xff]
  %248 = vset.pattern.permute.xlu0 0
  %249 = vperm.xlu0 %248, %v245
  %v250 = vpop.permute.xlu0 %249
  %251 = vset.pattern.permute.xlu0 0
  %252 = vperm.xlu0 %251, %v246
  %v253 = vpop.permute.xlu0 %252
  %254 = vset.pattern.permute.xlu0 0
  %255 = vperm.xlu0 %254, %v247
  %v256 = vpop.permute.xlu0 %255
  %vm257 = vcmp.eq.s32.totalorder %v244, %v250
  %vm258 = vcmp.eq.s32.totalorder %v244, %v253
  %vm259 = vcmp.eq.s32.totalorder %v244, %v256
  %v260 = vsel %vm257, 1, 0
  %v261 = vsel %vm258, 1, 0
  %v262 = vsel %vm259, 1, 0
  %v263 = vcvt.s32.f32 %v260
  %v264 = vcvt.s32.f32 %v261
  %v265 = vcvt.s32.f32 %v262
  %v266 = vld [vmem:[%s4] sm:$0xff]
  %v267 = vld [vmem:[%s4 + $0x8] sm:$0xf]
  %vm268 = vcmask 97280
  %v270 = vsel %vm268, %v263, 0
  %v273 = vsel %vm268, %v264, 0
  %v276 = vsel %vm268, %v265, 0
  %vm278 = vcmask 1043456
  %v280 = vsel %vm278, %v267, 0
  %282 = vmatprep.subr.mxu0 0.0
  %283 = vmatpush1.msra.mxu0 %v266
  %284 = vmatprep.subr.mxu0 0.0
  %285 = vmatpush1.msra.mxu0 %v280
  %286 = vmatprep.subr.mxu0 0.0
  %287 = vmatpush1.msra.mxu0 0.0
  %288 = vmatprep.subr.mxu0 0.0
  %289 = vmatpush1.msra.mxu0 0.0
  %290 = vmatprep.subr.mxu0 0.0
  %291 = vmatpush1.msra.mxu0 0.0
  %292 = vmatprep.subr.mxu0 0.0
  %293 = vmatpush1.msra.mxu0 0.0
  %294 = vmatprep.subr.mxu0 0.0
  %295 = vmatpush1.msra.mxu0 0.0
  %296 = vmatprep.subr.mxu0 0.0
  %297 = vmatpush1.msra.mxu0 0.0
  %298 = vmatprep.subr.mxu0 0.0
  %299 = vmatpush1.msra.mxu0 0.0
  %300 = vmatprep.subr.mxu0 0.0
  %301 = vmatpush1.msra.mxu0 0.0
  %302 = vmatprep.subr.mxu0 0.0
  %303 = vmatpush1.msra.mxu0 0.0
  %304 = vmatprep.subr.mxu0 0.0
  %305 = vmatpush1.msra.mxu0 0.0
  %306 = vmatprep.subr.mxu0 0.0
  %307 = vmatpush1.msra.mxu0 0.0
  %308 = vmatprep.subr.mxu0 0.0
  %309 = vmatpush1.msra.mxu0 0.0
  %310 = vmatprep.subr.mxu0 0.0
  %311 = vmatpush1.msra.mxu0 0.0
  %312 = vmatprep.subr.mxu0 0.0
  %313 = vmatpush1.msra.mxu0 0.0
  %314 = vmatprep.subr.mxu0 0.0
  %315 = vmatpush1.msra.mxu0 0.0
  %316 = vmatprep.subr.mxu0 0.0
  %317 = vmatpush1.msra.mxu0 0.0
  %318 = vmatprep.subr.mxu0 0.0
  %319 = vmatpush1.msra.mxu0 0.0
  %320 = vmatprep.subr.mxu0 0.0
  %321 = vmatpush1.msra.mxu0 0.0
  %322 = vmatprep.subr.mxu0 0.0
  %323 = vmatpush1.msra.mxu0 0.0
  %324 = vmatprep.subr.mxu0 0.0
  %325 = vmatpush1.msra.mxu0 0.0
  %326 = vmatprep.subr.mxu0 0.0
  %327 = vmatpush1.msra.mxu0 0.0
  %328 = vmatprep.subr.mxu0 0.0
  %329 = vmatpush1.msra.mxu0 0.0
  %330 = vmatprep.subr.mxu0 0.0
  %331 = vmatpush1.msra.mxu0 0.0
  %332 = vmatprep.subr.mxu0 0.0
  %333 = vmatpush1.msra.mxu0 0.0
  %334 = vmatprep.subr.mxu0 0.0
  %335 = vmatpush1.msra.mxu0 0.0
  %336 = vmatprep.subr.mxu0 0.0
  %337 = vmatpush1.msra.mxu0 0.0
  %338 = vmatprep.subr.mxu0 0.0
  %339 = vmatpush1.msra.mxu0 0.0
  %340 = vmatprep.subr.mxu0 0.0
  %341 = vmatpush1.msra.mxu0 0.0
  %342 = vmatprep.subr.mxu0 0.0
  %343 = vmatpush1.msra.mxu0 0.0
  %344 = vmatprep.subr.mxu0 0.0
  %345 = vmatpush1.msra.mxu0 0.0
  %346 = vmatprep.mubr.f32.mxu0 0.0
  %347 = vmatmul.mubr.f32.gmra.mrb[0].mxu0 %v270
  %v348 = vpop.f32.mrb[0].mxu0
  %v349 = vadd.f32 0.0, %v348
  %v350 = vpop.f32.mrb[0].mxu0
  %351 = vmatprep.mubr.f32.mxu0 0.0
  %352 = vmatmul.mubr.f32.gmra.mrb[0].mxu0 %v273
  %v353 = vpop.f32.mrb[0].mxu0
  %v354 = vadd.f32 0.0, %v353
  %v355 = vpop.f32.mrb[0].mxu0
  %356 = vmatprep.mubr.f32.mxu0 0.0
  %357 = vmatmul.mubr.f32.gmra.mrb[0].mxu0 %v276
  %v358 = vpop.f32.mrb[0].mxu0
  %v359 = vadd.f32 0.0, %v358
  %v360 = vpop.f32.mrb[0].mxu0
  %361 = vdwg.mxu0
  %v362 = vadd.f32 %v230, %v349
  %v363 = vadd.f32 %v235, %v354
  %v364 = vadd.f32 %v240, %v359
  %v365 = vld [vmem:[%s7 + $0x40] sm:$0xff]
  %v366 = vld [vmem:[%s7 + $0x48] sm:$0xff]
  %v367 = vld [vmem:[%s7 + $0x50] sm:$0xff]
  %v368 = vld [vmem:[%s7 + $0x58] sm:$0xff]
  %v369 = vld [vmem:[%s7 + $0x60] sm:$0x1]
  %v370 = vld [vmem:[%s7 + $0x68] sm:$0xff]
  %v371 = vld [vmem:[%s7 + $0x70] sm:$0xff]
  %v372 = vld [vmem:[%s7 + $0x78] sm:$0xff]
  %v373 = vld [vmem:[%s7 + $0x80] sm:$0xff]
  %v374 = vld [vmem:[%s7 + $0x88] sm:$0x1]
  %v375 = vlaneseq
  %v376 = vshrl.u32 %v375, 7
  %v377 = vsub.s32 0, %v376
  %v378 = vrot.slane %v369, %v377
  %v380 = vsel %vm153, %v362, 0
  %v383 = vsel %vm153, %v363, 0
  %v386 = vsel %vm153, %v364, 0
  %388 = vmatprep.subr.mxu0 0.0
  %389 = vmatpush1.msra.mxu0 %v365
  %390 = vmatprep.subr.mxu0 0.0
  %391 = vmatpush1.msra.mxu0 %v366
  %392 = vmatprep.subr.mxu0 0.0
  %393 = vmatpush1.msra.mxu0 %v367
  %394 = vmatprep.subr.mxu0 0.0
  %395 = vmatpush1.msra.mxu0 %v368
  %396 = vmatprep.subr.mxu0 0.0
  %397 = vmatpush1.msra.mxu0 0.0
  %398 = vmatprep.subr.mxu0 0.0
  %399 = vmatpush1.msra.mxu0 0.0
  %400 = vmatprep.subr.mxu0 0.0
  %401 = vmatpush1.msra.mxu0 0.0
  %402 = vmatprep.subr.mxu0 0.0
  %403 = vmatpush1.msra.mxu0 0.0
  %404 = vmatprep.subr.mxu0 0.0
  %405 = vmatpush1.msra.mxu0 0.0
  %406 = vmatprep.subr.mxu0 0.0
  %407 = vmatpush1.msra.mxu0 0.0
  %408 = vmatprep.subr.mxu0 0.0
  %409 = vmatpush1.msra.mxu0 0.0
  %410 = vmatprep.subr.mxu0 0.0
  %411 = vmatpush1.msra.mxu0 0.0
  %412 = vmatprep.subr.mxu0 0.0
  %413 = vmatpush1.msra.mxu0 0.0
  %414 = vmatprep.subr.mxu0 0.0
  %415 = vmatpush1.msra.mxu0 0.0
  %416 = vmatprep.subr.mxu0 0.0
  %417 = vmatpush1.msra.mxu0 0.0
  %418 = vmatprep.subr.mxu0 0.0
  %419 = vmatpush1.msra.mxu0 0.0
  %420 = vmatprep.subr.mxu0 0.0
  %421 = vmatpush1.msra.mxu0 0.0
  %422 = vmatprep.subr.mxu0 0.0
  %423 = vmatpush1.msra.mxu0 0.0
  %424 = vmatprep.subr.mxu0 0.0
  %425 = vmatpush1.msra.mxu0 0.0
  %426 = vmatprep.subr.mxu0 0.0
  %427 = vmatpush1.msra.mxu0 0.0
  %428 = vmatprep.subr.mxu0 0.0
  %429 = vmatpush1.msra.mxu0 0.0
  %430 = vmatprep.subr.mxu0 0.0
  %431 = vmatpush1.msra.mxu0 0.0
  %432 = vmatprep.subr.mxu0 0.0
  %433 = vmatpush1.msra.mxu0 0.0
  %434 = vmatprep.subr.mxu0 0.0
  %435 = vmatpush1.msra.mxu0 0.0
  %436 = vmatprep.subr.mxu0 0.0
  %437 = vmatpush1.msra.mxu0 0.0
  %438 = vmatprep.subr.mxu0 0.0
  %439 = vmatpush1.msra.mxu0 0.0
  %440 = vmatprep.subr.mxu0 0.0
  %441 = vmatpush1.msra.mxu0 0.0
  %442 = vmatprep.subr.mxu0 0.0
  %443 = vmatpush1.msra.mxu0 0.0
  %444 = vmatprep.subr.mxu0 0.0
  %445 = vmatpush1.msra.mxu0 0.0
  %446 = vmatprep.subr.mxu0 0.0
  %447 = vmatpush1.msra.mxu0 0.0
  %448 = vmatprep.subr.mxu0 0.0
  %449 = vmatpush1.msra.mxu0 0.0
  %450 = vmatprep.subr.mxu0 0.0
  %451 = vmatpush1.msra.mxu0 0.0
  %452 = vmatprep.mubr.f32.mxu0 0.0
  %453 = vmatmul.mubr.f32.gmra.mrb[0].mxu0 %v380
  %v454 = vpop.f32.mrb[0].mxu0
  %v455 = vadd.f32 %v378, %v454
  %v456 = vpop.f32.mrb[0].mxu0
  %457 = vmatprep.mubr.f32.mxu0 0.0
  %458 = vmatmul.mubr.f32.gmra.mrb[0].mxu0 %v383
  %v459 = vpop.f32.mrb[0].mxu0
  %v460 = vadd.f32 %v378, %v459
  %v461 = vpop.f32.mrb[0].mxu0
  %462 = vmatprep.mubr.f32.mxu0 0.0
  %463 = vmatmul.mubr.f32.gmra.mrb[0].mxu0 %v386
  %v464 = vpop.f32.mrb[0].mxu0
  %v465 = vadd.f32 %v378, %v464
  %v466 = vpop.f32.mrb[0].mxu0
  %467 = vdwg.mxu0
  %vm468 = vcmp.gt.f32.partialorder %v455, 0.0
  %vm469 = vcmp.gt.f32.partialorder %v460, 0.0
  %vm470 = vcmp.gt.f32.partialorder %v465, 0.0
  %v471 = vmul.f32 %v455, 1.442695
  %v472 = vpow.pop %v471
  %v473 = vmul.f32 %v460, 1.442695
  %v474 = vpow.pop %v473
  %v475 = vmul.f32 %v465, 1.442695
  %v476 = vpow.pop %v475
  %v477 = vsub.f32 %v472, 1.0
  %v478 = vsub.f32 %v474, 1.0
  %v479 = vsub.f32 %v476, 1.0
  %v480 = vsel %vm468, %v455, %v477
  %v481 = vsel %vm469, %v460, %v478
  %v482 = vsel %vm470, %v465, %v479
  %v483 = vlaneseq
  %v484 = vshrl.u32 %v483, 7
  %v485 = vsub.s32 0, %v484
  %v486 = vrot.slane %v374, %v485
  %v488 = vsel %vm153, %v480, 0
  %v491 = vsel %vm153, %v481, 0
  %v494 = vsel %vm153, %v482, 0
  %496 = vmatprep.subr.mxu0 0.0
  %497 = vmatpush1.msra.mxu0 %v370
  %498 = vmatprep.subr.mxu0 0.0
  %499 = vmatpush1.msra.mxu0 %v371
  %500 = vmatprep.subr.mxu0 0.0
  %501 = vmatpush1.msra.mxu0 %v372
  %502 = vmatprep.subr.mxu0 0.0
  %503 = vmatpush1.msra.mxu0 %v373
  %504 = vmatprep.subr.mxu0 0.0
  %505 = vmatpush1.msra.mxu0 0.0
  %506 = vmatprep.subr.mxu0 0.0
  %507 = vmatpush1.msra.mxu0 0.0
  %508 = vmatprep.subr.mxu0 0.0
  %509 = vmatpush1.msra.mxu0 0.0
  %510 = vmatprep.subr.mxu0 0.0
  %511 = vmatpush1.msra.mxu0 0.0
  %512 = vmatprep.subr.mxu0 0.0
  %513 = vmatpush1.msra.mxu0 0.0
  %514 = vmatprep.subr.mxu0 0.0
  %515 = vmatpush1.msra.mxu0 0.0
  %516 = vmatprep.subr.mxu0 0.0
  %517 = vmatpush1.msra.mxu0 0.0
  %518 = vmatprep.subr.mxu0 0.0
  %519 = vmatpush1.msra.mxu0 0.0
  %520 = vmatprep.subr.mxu0 0.0
  %521 = vmatpush1.msra.mxu0 0.0
  %522 = vmatprep.subr.mxu0 0.0
  %523 = vmatpush1.msra.mxu0 0.0
  %524 = vmatprep.subr.mxu0 0.0
  %525 = vmatpush1.msra.mxu0 0.0
  %526 = vmatprep.subr.mxu0 0.0
  %527 = vmatpush1.msra.mxu0 0.0
  %528 = vmatprep.subr.mxu0 0.0
  %529 = vmatpush1.msra.mxu0 0.0
  %530 = vmatprep.subr.mxu0 0.0
  %531 = vmatpush1.msra.mxu0 0.0
  %532 = vmatprep.subr.mxu0 0.0
  %533 = vmatpush1.msra.mxu0 0.0
  %534 = vmatprep.subr.mxu0 0.0
  %535 = vmatpush1.msra.mxu0 0.0
  %536 = vmatprep.subr.mxu0 0.0
  %537 = vmatpush1.msra.mxu0 0.0
  %538 = vmatprep.subr.mxu0 0.0
  %539 = vmatpush1.msra.mxu0 0.0
  %540 = vmatprep.subr.mxu0 0.0
  %541 = vmatpush1.msra.mxu0 0.0
  %542 = vmatprep.subr.mxu0 0.0
  %543 = vmatpush1.msra.mxu0 0.0
  %544 = vmatprep.subr.mxu0 0.0
  %545 = vmatpush1.msra.mxu0 0.0
  %546 = vmatprep.subr.mxu0 0.0
  %547 = vmatpush1.msra.mxu0 0.0
  %548 = vmatprep.subr.mxu0 0.0
  %549 = vmatpush1.msra.mxu0 0.0
  %550 = vmatprep.subr.mxu0 0.0
  %551 = vmatpush1.msra.mxu0 0.0
  %552 = vmatprep.subr.mxu0 0.0
  %553 = vmatpush1.msra.mxu0 0.0
  %554 = vmatprep.subr.mxu0 0.0
  %555 = vmatpush1.msra.mxu0 0.0
  %556 = vmatprep.subr.mxu0 0.0
  %557 = vmatpush1.msra.mxu0 0.0
  %558 = vmatprep.subr.mxu0 0.0
  %559 = vmatpush1.msra.mxu0 0.0
  %560 = vmatprep.mubr.f32.mxu0 0.0
  %561 = vmatmul.mubr.f32.gmra.mrb[0].mxu0 %v488
  %v562 = vpop.f32.mrb[0].mxu0
  %v563 = vadd.f32 %v486, %v562
  %v564 = vpop.f32.mrb[0].mxu0
  %565 = vmatprep.mubr.f32.mxu0 0.0
  %566 = vmatmul.mubr.f32.gmra.mrb[0].mxu0 %v491
  %v567 = vpop.f32.mrb[0].mxu0
  %v568 = vadd.f32 %v486, %v567
  %v569 = vpop.f32.mrb[0].mxu0
  %570 = vmatprep.mubr.f32.mxu0 0.0
  %571 = vmatmul.mubr.f32.gmra.mrb[0].mxu0 %v494
  %v572 = vpop.f32.mrb[0].mxu0
  %v573 = vadd.f32 %v486, %v572
  %v574 = vpop.f32.mrb[0].mxu0
  %575 = vdwg.mxu0
  %v576 = vlaneseq
  %v577 = vshrl.u32 %v576, 7
  %v578 = vld [vmem:[%s1] sm:$0x1]
  %v579 = vlaneseq
  %v580 = vshrl.u32 %v579, 7
  %v581 = vsub.s32 0, %v580
  %v582 = vrot.slane %v578, %v581
  %vm583 = vcmp.eq.s32.totalorder %v577, %v582
  %v584 = vsel %vm583, 1, 0
  %v585 = vcvt.s32.f32 %v584
  %vm586 = vcmask 195584
  %v588 = vsel %vm586, %v585, 0
  %590 = vmatprep.subr.mxu0 0.0
  %591 = vmatpush1.msra.mxu0 %v563
  %592 = vmatprep.subr.mxu0 0.0
  %593 = vmatpush1.msra.mxu0 %v568
  %594 = vmatprep.subr.mxu0 0.0
  %595 = vmatpush1.msra.mxu0 %v573
  %596 = vmatprep.subr.mxu0 0.0
  %597 = vmatpush1.msra.mxu0 0.0
  %598 = vmatprep.subr.mxu0 0.0
  %599 = vmatpush1.msra.mxu0 0.0
  %600 = vmatprep.subr.mxu0 0.0
  %601 = vmatpush1.msra.mxu0 0.0
  %602 = vmatprep.subr.mxu0 0.0
  %603 = vmatpush1.msra.mxu0 0.0
  %604 = vmatprep.subr.mxu0 0.0
  %605 = vmatpush1.msra.mxu0 0.0
  %606 = vmatprep.subr.mxu0 0.0
  %607 = vmatpush1.msra.mxu0 0.0
  %608 = vmatprep.subr.mxu0 0.0
  %609 = vmatpush1.msra.mxu0 0.0
  %610 = vmatprep.subr.mxu0 0.0
  %611 = vmatpush1.msra.mxu0 0.0
  %612 = vmatprep.subr.mxu0 0.0
  %613 = vmatpush1.msra.mxu0 0.0
  %614 = vmatprep.subr.mxu0 0.0
  %615 = vmatpush1.msra.mxu0 0.0
  %616 = vmatprep.subr.mxu0 0.0
  %617 = vmatpush1.msra.mxu0 0.0
  %618 = vmatprep.subr.mxu0 0.0
  %619 = vmatpush1.msra.mxu0 0.0
  %620 = vmatprep.subr.mxu0 0.0
  %621 = vmatpush1.msra.mxu0 0.0
  %622 = vmatprep.subr.mxu0 0.0
  %623 = vmatpush1.msra.mxu0 0.0
  %624 = vmatprep.subr.mxu0 0.0
  %625 = vmatpush1.msra.mxu0 0.0
  %626 = vmatprep.subr.mxu0 0.0
  %627 = vmatpush1.msra.mxu0 0.0
  %628 = vmatprep.subr.mxu0 0.0
  %629 = vmatpush1.msra.mxu0 0.0
  %630 = vmatprep.subr.mxu0 0.0
  %631 = vmatpush1.msra.mxu0 0.0
  %632 = vmatprep.subr.mxu0 0.0
  %633 = vmatpush1.msra.mxu0 0.0
  %634 = vmatprep.subr.mxu0 0.0
  %635 = vmatpush1.msra.mxu0 0.0
  %636 = vmatprep.subr.mxu0 0.0
  %637 = vmatpush1.msra.mxu0 0.0
  %638 = vmatprep.subr.mxu0 0.0
  %639 = vmatpush1.msra.mxu0 0.0
  %640 = vmatprep.subr.mxu0 0.0
  %641 = vmatpush1.msra.mxu0 0.0
  %642 = vmatprep.subr.mxu0 0.0
  %643 = vmatpush1.msra.mxu0 0.0
  %644 = vmatprep.subr.mxu0 0.0
  %645 = vmatpush1.msra.mxu0 0.0
  %646 = vmatprep.subr.mxu0 0.0
  %647 = vmatpush1.msra.mxu0 0.0
  %648 = vmatprep.subr.mxu0 0.0
  %649 = vmatpush1.msra.mxu0 0.0
  %650 = vmatprep.subr.mxu0 0.0
  %651 = vmatpush1.msra.mxu0 0.0
  %652 = vmatprep.subr.mxu0 0.0
  %653 = vmatpush1.msra.mxu0 0.0
  %654 = vmatprep.mubr.f32.mxu0 0.0
  %655 = vmatmul.mubr.f32.gmra.mrb[0].mxu0 %v588
  %v656 = vpop.f32.mrb[0].mxu0
  %v657 = vadd.f32 0.0, %v656
  %v658 = vpop.f32.mrb[0].mxu0
  %659 = vdwg.mxu0
  %v660 = vld [vmem:[%s7 + $0x90] sm:$0xff]
  %v661 = vld [vmem:[%s7 + $0x98] sm:$0xff]
  %v662 = vld [vmem:[%s7 + $0xa0] sm:$0xff]
  %v663 = vld [vmem:[%s7 + $0xa8] sm:$0xff]
  %v664 = vld [vmem:[%s7 + $0xb0] sm:$0x1]
  %v665 = vld [vmem:[%s7 + $0xb8] sm:$0xff]
  %v666 = vld [vmem:[%s7 + $0xc0] sm:$0xff]
  %v667 = vld [vmem:[%s7 + $0xc8] sm:$0xff]
  %v668 = vld [vmem:[%s7 + $0xd0] sm:$0xff]
  %v669 = vld [vmem:[%s7 + $0xd8] sm:$0x1]
  %v670 = vlaneseq
  %v671 = vshrl.u32 %v670, 7
  %v672 = vsub.s32 0, %v671
  %v673 = vrot.slane %v664, %v672
  %v675 = vsel %vm153, %v657, 0
  %677 = vmatprep.subr.mxu0 0.0
  %678 = vmatpush1.msra.mxu0 %v660
  %679 = vmatprep.subr.mxu0 0.0
  %680 = vmatpush1.msra.mxu0 %v661
  %681 = vmatprep.subr.mxu0 0.0
  %682 = vmatpush1.msra.mxu0 %v662
  %683 = vmatprep.subr.mxu0 0.0
  %684 = vmatpush1.msra.mxu0 %v663
  %685 = vmatprep.subr.mxu0 0.0
  %686 = vmatpush1.msra.mxu0 0.0
  %687 = vmatprep.subr.mxu0 0.0
  %688 = vmatpush1.msra.mxu0 0.0
  %689 = vmatprep.subr.mxu0 0.0
  %690 = vmatpush1.msra.mxu0 0.0
  %691 = vmatprep.subr.mxu0 0.0
  %692 = vmatpush1.msra.mxu0 0.0
  %693 = vmatprep.subr.mxu0 0.0
  %694 = vmatpush1.msra.mxu0 0.0
  %695 = vmatprep.subr.mxu0 0.0
  %696 = vmatpush1.msra.mxu0 0.0
  %697 = vmatprep.subr.mxu0 0.0
  %698 = vmatpush1.msra.mxu0 0.0
  %699 = vmatprep.subr.mxu0 0.0
  %700 = vmatpush1.msra.mxu0 0.0
  %701 = vmatprep.subr.mxu0 0.0
  %702 = vmatpush1.msra.mxu0 0.0
  %703 = vmatprep.subr.mxu0 0.0
  %704 = vmatpush1.msra.mxu0 0.0
  %705 = vmatprep.subr.mxu0 0.0
  %706 = vmatpush1.msra.mxu0 0.0
  %707 = vmatprep.subr.mxu0 0.0
  %708 = vmatpush1.msra.mxu0 0.0
  %709 = vmatprep.subr.mxu0 0.0
  %710 = vmatpush1.msra.mxu0 0.0
  %711 = vmatprep.subr.mxu0 0.0
  %712 = vmatpush1.msra.mxu0 0.0
  %713 = vmatprep.subr.mxu0 0.0
  %714 = vmatpush1.msra.mxu0 0.0
  %715 = vmatprep.subr.mxu0 0.0
  %716 = vmatpush1.msra.mxu0 0.0
  %717 = vmatprep.subr.mxu0 0.0
  %718 = vmatpush1.msra.mxu0 0.0
  %719 = vmatprep.subr.mxu0 0.0
  %720 = vmatpush1.msra.mxu0 0.0
  %721 = vmatprep.subr.mxu0 0.0
  %722 = vmatpush1.msra.mxu0 0.0
  %723 = vmatprep.subr.mxu0 0.0
  %724 = vmatpush1.msra.mxu0 0.0
  %725 = vmatprep.subr.mxu0 0.0
  %726 = vmatpush1.msra.mxu0 0.0
  %727 = vmatprep.subr.mxu0 0.0
  %728 = vmatpush1.msra.mxu0 0.0
  %729 = vmatprep.subr.mxu0 0.0
  %730 = vmatpush1.msra.mxu0 0.0
  %731 = vmatprep.subr.mxu0 0.0
  %732 = vmatpush1.msra.mxu0 0.0
  %733 = vmatprep.subr.mxu0 0.0
  %734 = vmatpush1.msra.mxu0 0.0
  %735 = vmatprep.subr.mxu0 0.0
  %736 = vmatpush1.msra.mxu0 0.0
  %737 = vmatprep.subr.mxu0 0.0
  %738 = vmatpush1.msra.mxu0 0.0
  %739 = vmatprep.subr.mxu0 0.0
  %740 = vmatpush1.msra.mxu0 0.0
  %741 = vmatprep.mubr.f32.mxu0 0.0
  %742 = vmatmul.mubr.f32.gmra.mrb[0].mxu0 %v675
  %v743 = vpop.f32.mrb[0].mxu0
  %v744 = vadd.f32 %v673, %v743
  %v745 = vpop.f32.mrb[0].mxu0
  %746 = vdwg.mxu0
  %vm747 = vcmp.gt.f32.partialorder %v744, 0.0
  %v748 = vmul.f32 %v744, 1.442695
  %v749 = vpow.pop %v748
  %v750 = vsub.f32 %v749, 1.0
  %v751 = vsel %vm747, %v744, %v750
  %v752 = vlaneseq
  %v753 = vshrl.u32 %v752, 7
  %v754 = vsub.s32 0, %v753
  %v755 = vrot.slane %v669, %v754
  %v757 = vsel %vm153, %v751, 0
  %759 = vmatprep.subr.mxu0 0.0
  %760 = vmatpush1.msra.mxu0 %v665
  %761 = vmatprep.subr.mxu0 0.0
  %762 = vmatpush1.msra.mxu0 %v666
  %763 = vmatprep.subr.mxu0 0.0
  %764 = vmatpush1.msra.mxu0 %v667
  %765 = vmatprep.subr.mxu0 0.0
  %766 = vmatpush1.msra.mxu0 %v668
  %767 = vmatprep.subr.mxu0 0.0
  %768 = vmatpush1.msra.mxu0 0.0
  %769 = vmatprep.subr.mxu0 0.0
  %770 = vmatpush1.msra.mxu0 0.0
  %771 = vmatprep.subr.mxu0 0.0
  %772 = vmatpush1.msra.mxu0 0.0
  %773 = vmatprep.subr.mxu0 0.0
  %774 = vmatpush1.msra.mxu0 0.0
  %775 = vmatprep.subr.mxu0 0.0
  %776 = vmatpush1.msra.mxu0 0.0
  %777 = vmatprep.subr.mxu0 0.0
  %778 = vmatpush1.msra.mxu0 0.0
  %779 = vmatprep.subr.mxu0 0.0
  %780 = vmatpush1.msra.mxu0 0.0
  %781 = vmatprep.subr.mxu0 0.0
  %782 = vmatpush1.msra.mxu0 0.0
  %783 = vmatprep.subr.mxu0 0.0
  %784 = vmatpush1.msra.mxu0 0.0
  %785 = vmatprep.subr.mxu0 0.0
  %786 = vmatpush1.msra.mxu0 0.0
  %787 = vmatprep.subr.mxu0 0.0
  %788 = vmatpush1.msra.mxu0 0.0
  %789 = vmatprep.subr.mxu0 0.0
  %790 = vmatpush1.msra.mxu0 0.0
  %791 = vmatprep.subr.mxu0 0.0
  %792 = vmatpush1.msra.mxu0 0.0
  %793 = vmatprep.subr.mxu0 0.0
  %794 = vmatpush1.msra.mxu0 0.0
  %795 = vmatprep.subr.mxu0 0.0
  %796 = vmatpush1.msra.mxu0 0.0
  %797 = vmatprep.subr.mxu0 0.0
  %798 = vmatpush1.msra.mxu0 0.0
  %799 = vmatprep.subr.mxu0 0.0
  %800 = vmatpush1.msra.mxu0 0.0
  %801 = vmatprep.subr.mxu0 0.0
  %802 = vmatpush1.msra.mxu0 0.0
  %803 = vmatprep.subr.mxu0 0.0
  %804 = vmatpush1.msra.mxu0 0.0
  %805 = vmatprep.subr.mxu0 0.0
  %806 = vmatpush1.msra.mxu0 0.0
  %807 = vmatprep.subr.mxu0 0.0
  %808 = vmatpush1.msra.mxu0 0.0
  %809 = vmatprep.subr.mxu0 0.0
  %810 = vmatpush1.msra.mxu0 0.0
  %811 = vmatprep.subr.mxu0 0.0
  %812 = vmatpush1.msra.mxu0 0.0
  %813 = vmatprep.subr.mxu0 0.0
  %814 = vmatpush1.msra.mxu0 0.0
  %815 = vmatprep.subr.mxu0 0.0
  %816 = vmatpush1.msra.mxu0 0.0
  %817 = vmatprep.subr.mxu0 0.0
  %818 = vmatpush1.msra.mxu0 0.0
  %819 = vmatprep.subr.mxu0 0.0
  %820 = vmatpush1.msra.mxu0 0.0
  %821 = vmatprep.subr.mxu0 0.0
  %822 = vmatpush1.msra.mxu0 0.0
  %823 = vmatprep.mubr.f32.mxu0 0.0
  %824 = vmatmul.mubr.f32.gmra.mrb[0].mxu0 %v757
  %v825 = vpop.f32.mrb[0].mxu0
  %v826 = vadd.f32 %v755, %v825
  %v827 = vpop.f32.mrb[0].mxu0
  %828 = vdwg.mxu0
  %v829 = vld [vmem:[%s2] sm:$0x1]
  %v830 = vlaneseq
  %v831 = vshrl.u32 %v830, 7
  %v832 = vsub.s32 0, %v831
  %v833 = vrot.slane %v829, %v832
  %vm834 = vcmp.eq.s32.totalorder %v577, %v833
  %v835 = vsel %vm834, 1, 0
  %v836 = vcvt.s32.f32 %v835
  %v837 = vld [vmem:[%s6] sm:$0xff]
  %v838 = vld [vmem:[%s6 + $0x8] sm:$0xff]
  %v839 = vld [vmem:[%s6 + $0x10] sm:$0x3]
  %vm840 = vcmask 146432
  %v842 = vsel %vm840, %v836, 0
  %vm844 = vcmask 1041408
  %v846 = vsel %vm844, %v839, 0
  %848 = vmatprep.subr.mxu0 0.0
  %849 = vmatpush1.msra.mxu0 %v837
  %850 = vmatprep.subr.mxu0 0.0
  %851 = vmatpush1.msra.mxu0 %v838
  %852 = vmatprep.subr.mxu0 0.0
  %853 = vmatpush1.msra.mxu0 %v846
  %854 = vmatprep.subr.mxu0 0.0
  %855 = vmatpush1.msra.mxu0 0.0
  %856 = vmatprep.subr.mxu0 0.0
  %857 = vmatpush1.msra.mxu0 0.0
  %858 = vmatprep.subr.mxu0 0.0
  %859 = vmatpush1.msra.mxu0 0.0
  %860 = vmatprep.subr.mxu0 0.0
  %861 = vmatpush1.msra.mxu0 0.0
  %862 = vmatprep.subr.mxu0 0.0
  %863 = vmatpush1.msra.mxu0 0.0
  %864 = vmatprep.subr.mxu0 0.0
  %865 = vmatpush1.msra.mxu0 0.0
  %866 = vmatprep.subr.mxu0 0.0
  %867 = vmatpush1.msra.mxu0 0.0
  %868 = vmatprep.subr.mxu0 0.0
  %869 = vmatpush1.msra.mxu0 0.0
  %870 = vmatprep.subr.mxu0 0.0
  %871 = vmatpush1.msra.mxu0 0.0
  %872 = vmatprep.subr.mxu0 0.0
  %873 = vmatpush1.msra.mxu0 0.0
  %874 = vmatprep.subr.mxu0 0.0
  %875 = vmatpush1.msra.mxu0 0.0
  %876 = vmatprep.subr.mxu0 0.0
  %877 = vmatpush1.msra.mxu0 0.0
  %878 = vmatprep.subr.mxu0 0.0
  %879 = vmatpush1.msra.mxu0 0.0
  %880 = vmatprep.subr.mxu0 0.0
  %881 = vmatpush1.msra.mxu0 0.0
  %882 = vmatprep.subr.mxu0 0.0
  %883 = vmatpush1.msra.mxu0 0.0
  %884 = vmatprep.subr.mxu0 0.0
  %885 = vmatpush1.msra.mxu0 0.0
  %886 = vmatprep.subr.mxu0 0.0
  %887 = vmatpush1.msra.mxu0 0.0
  %888 = vmatprep.subr.mxu0 0.0
  %889 = vmatpush1.msra.mxu0 0.0
  %890 = vmatprep.subr.mxu0 0.0
  %891 = vmatpush1.msra.mxu0 0.0
  %892 = vmatprep.subr.mxu0 0.0
  %893 = vmatpush1.msra.mxu0 0.0
  %894 = vmatprep.subr.mxu0 0.0
  %895 = vmatpush1.msra.mxu0 0.0
  %896 = vmatprep.subr.mxu0 0.0
  %897 = vmatpush1.msra.mxu0 0.0
  %898 = vmatprep.subr.mxu0 0.0
  %899 = vmatpush1.msra.mxu0 0.0
  %900 = vmatprep.subr.mxu0 0.0
  %901 = vmatpush1.msra.mxu0 0.0
  %902 = vmatprep.subr.mxu0 0.0
  %903 = vmatpush1.msra.mxu0 0.0
  %904 = vmatprep.subr.mxu0 0.0
  %905 = vmatpush1.msra.mxu0 0.0
  %906 = vmatprep.subr.mxu0 0.0
  %907 = vmatpush1.msra.mxu0 0.0
  %908 = vmatprep.subr.mxu0 0.0
  %909 = vmatpush1.msra.mxu0 0.0
  %910 = vmatprep.subr.mxu0 0.0
  %911 = vmatpush1.msra.mxu0 0.0
  %912 = vmatprep.mubr.f32.mxu0 0.0
  %913 = vmatmul.mubr.f32.gmra.mrb[0].mxu0 %v842
  %v914 = vpop.f32.mrb[0].mxu0
  %v915 = vadd.f32 0.0, %v914
  %v916 = vpop.f32.mrb[0].mxu0
  %917 = vdwg.mxu0
  %v918 = vld [vmem:[%s3] sm:$0x3f]
  %920 = vset.pattern.permute.xlu0 0
  %921 = vperm.xlu0 %920, %v918
  %v922 = vpop.permute.xlu0 %921
  %v924 = vmul.f32 %v915, %v922
  %v925 = vld [vmem:[%s7 + $0xe0] sm:$0xff]
  %v926 = vld [vmem:[%s7 + $0xe8] sm:$0x1]
  %v927 = vld [vmem:[%s7 + $0xf0] sm:$0xff]
  %v928 = vld [vmem:[%s7 + $0xf8] sm:$0xff]
  %v929 = vld [vmem:[%s7 + $0x100] sm:$0xff]
  %v930 = vld [vmem:[%s7 + $0x108] sm:$0xff]
  %v931 = vld [vmem:[%s7 + $0x110] sm:$0x1]
  %v932 = vlaneseq
  %v933 = vshrl.u32 %v932, 7
  %v934 = vsub.s32 0, %v933
  %v935 = vrot.slane %v926, %v934
  %vm936 = vcmask 64512
  %v938 = vsel %vm936, %v924, 0
  %940 = vmatprep.subr.mxu0 0.0
  %941 = vmatpush1.msra.mxu0 %v925
  %942 = vmatprep.subr.mxu0 0.0
  %943 = vmatpush1.msra.mxu0 0.0
  %944 = vmatprep.subr.mxu0 0.0
  %945 = vmatpush1.msra.mxu0 0.0
  %946 = vmatprep.subr.mxu0 0.0
  %947 = vmatpush1.msra.mxu0 0.0
  %948 = vmatprep.subr.mxu0 0.0
  %949 = vmatpush1.msra.mxu0 0.0
  %950 = vmatprep.subr.mxu0 0.0
  %951 = vmatpush1.msra.mxu0 0.0
  %952 = vmatprep.subr.mxu0 0.0
  %953 = vmatpush1.msra.mxu0 0.0
  %954 = vmatprep.subr.mxu0 0.0
  %955 = vmatpush1.msra.mxu0 0.0
  %956 = vmatprep.subr.mxu0 0.0
  %957 = vmatpush1.msra.mxu0 0.0
  %958 = vmatprep.subr.mxu0 0.0
  %959 = vmatpush1.msra.mxu0 0.0
  %960 = vmatprep.subr.mxu0 0.0
  %961 = vmatpush1.msra.mxu0 0.0
  %962 = vmatprep.subr.mxu0 0.0
  %963 = vmatpush1.msra.mxu0 0.0
  %964 = vmatprep.subr.mxu0 0.0
  %965 = vmatpush1.msra.mxu0 0.0
  %966 = vmatprep.subr.mxu0 0.0
  %967 = vmatpush1.msra.mxu0 0.0
  %968 = vmatprep.subr.mxu0 0.0
  %969 = vmatpush1.msra.mxu0 0.0
  %970 = vmatprep.subr.mxu0 0.0
  %971 = vmatpush1.msra.mxu0 0.0
  %972 = vmatprep.subr.mxu0 0.0
  %973 = vmatpush1.msra.mxu0 0.0
  %974 = vmatprep.subr.mxu0 0.0
  %975 = vmatpush1.msra.mxu0 0.0
  %976 = vmatprep.subr.mxu0 0.0
  %977 = vmatpush1.msra.mxu0 0.0
  %978 = vmatprep.subr.mxu0 0.0
  %979 = vmatpush1.msra.mxu0 0.0
  %980 = vmatprep.subr.mxu0 0.0
  %981 = vmatpush1.msra.mxu0 0.0
  %982 = vmatprep.subr.mxu0 0.0
  %983 = vmatpush1.msra.mxu0 0.0
  %984 = vmatprep.subr.mxu0 0.0
  %985 = vmatpush1.msra.mxu0 0.0
  %986 = vmatprep.subr.mxu0 0.0
  %987 = vmatpush1.msra.mxu0 0.0
  %988 = vmatprep.subr.mxu0 0.0
  %989 = vmatpush1.msra.mxu0 0.0
  %990 = vmatprep.subr.mxu0 0.0
  %991 = vmatpush1.msra.mxu0 0.0
  %992 = vmatprep.subr.mxu0 0.0
  %993 = vmatpush1.msra.mxu0 0.0
  %994 = vmatprep.subr.mxu0 0.0
  %995 = vmatpush1.msra.mxu0 0.0
  %996 = vmatprep.subr.mxu0 0.0
  %997 = vmatpush1.msra.mxu0 0.0
  %998 = vmatprep.subr.mxu0 0.0
  %999 = vmatpush1.msra.mxu0 0.0
  %1000 = vmatprep.subr.mxu0 0.0
  %1001 = vmatpush1.msra.mxu0 0.0
  %1002 = vmatprep.subr.mxu0 0.0
  %1003 = vmatpush1.msra.mxu0 0.0
  %1004 = vmatprep.mubr.f32.mxu0 0.0
  %1005 = vmatmul.mubr.f32.gmra.mrb[0].mxu0 %v938
  %v1006 = vpop.f32.mrb[0].mxu0
  %v1007 = vadd.f32 %v935, %v1006
  %v1008 = vpop.f32.mrb[0].mxu0
  %1009 = vdwg.mxu0
  %vm1010 = vcmp.gt.f32.partialorder %v1007, 0.0
  %v1011 = vmul.f32 %v1007, 1.442695
  %v1012 = vpow.pop %v1011
  %v1013 = vsub.f32 %v1012, 1.0
  %v1014 = vsel %vm1010, %v1007, %v1013
  %v1015 = vlaneseq
  %v1016 = vshrl.u32 %v1015, 7
  %v1017 = vsub.s32 0, %v1016
  %v1018 = vrot.slane %v931, %v1017
  %v1020 = vsel %vm153, %v1014, 0
  %1022 = vmatprep.subr.mxu0 0.0
  %1023 = vmatpush1.msra.mxu0 %v927
  %1024 = vmatprep.subr.mxu0 0.0
  %1025 = vmatpush1.msra.mxu0 %v928
  %1026 = vmatprep.subr.mxu0 0.0
  %1027 = vmatpush1.msra.mxu0 %v929
  %1028 = vmatprep.subr.mxu0 0.0
  %1029 = vmatpush1.msra.mxu0 %v930
  %1030 = vmatprep.subr.mxu0 0.0
  %1031 = vmatpush1.msra.mxu0 0.0
  %1032 = vmatprep.subr.mxu0 0.0
  %1033 = vmatpush1.msra.mxu0 0.0
  %1034 = vmatprep.subr.mxu0 0.0
  %1035 = vmatpush1.msra.mxu0 0.0
  %1036 = vmatprep.subr.mxu0 0.0
  %1037 = vmatpush1.msra.mxu0 0.0
  %1038 = vmatprep.subr.mxu0 0.0
  %1039 = vmatpush1.msra.mxu0 0.0
  %1040 = vmatprep.subr.mxu0 0.0
  %1041 = vmatpush1.msra.mxu0 0.0
  %1042 = vmatprep.subr.mxu0 0.0
  %1043 = vmatpush1.msra.mxu0 0.0
  %1044 = vmatprep.subr.mxu0 0.0
  %1045 = vmatpush1.msra.mxu0 0.0
  %1046 = vmatprep.subr.mxu0 0.0
  %1047 = vmatpush1.msra.mxu0 0.0
  %1048 = vmatprep.subr.mxu0 0.0
  %1049 = vmatpush1.msra.mxu0 0.0
  %1050 = vmatprep.subr.mxu0 0.0
  %1051 = vmatpush1.msra.mxu0 0.0
  %1052 = vmatprep.subr.mxu0 0.0
  %1053 = vmatpush1.msra.mxu0 0.0
  %1054 = vmatprep.subr.mxu0 0.0
  %1055 = vmatpush1.msra.mxu0 0.0
  %1056 = vmatprep.subr.mxu0 0.0
  %1057 = vmatpush1.msra.mxu0 0.0
  %1058 = vmatprep.subr.mxu0 0.0
  %1059 = vmatpush1.msra.mxu0 0.0
  %1060 = vmatprep.subr.mxu0 0.0
  %1061 = vmatpush1.msra.mxu0 0.0
  %1062 = vmatprep.subr.mxu0 0.0
  %1063 = vmatpush1.msra.mxu0 0.0
  %1064 = vmatprep.subr.mxu0 0.0
  %1065 = vmatpush1.msra.mxu0 0.0
  %1066 = vmatprep.subr.mxu0 0.0
  %1067 = vmatpush1.msra.mxu0 0.0
  %1068 = vmatprep.subr.mxu0 0.0
  %1069 = vmatpush1.msra.mxu0 0.0
  %1070 = vmatprep.subr.mxu0 0.0
  %1071 = vmatpush1.msra.mxu0 0.0
  %1072 = vmatprep.subr.mxu0 0.0
  %1073 = vmatpush1.msra.mxu0 0.0
  %1074 = vmatprep.subr.mxu0 0.0
  %1075 = vmatpush1.msra.mxu0 0.0
  %1076 = vmatprep.subr.mxu0 0.0
  %1077 = vmatpush1.msra.mxu0 0.0
  %1078 = vmatprep.subr.mxu0 0.0
  %1079 = vmatpush1.msra.mxu0 0.0
  %1080 = vmatprep.subr.mxu0 0.0
  %1081 = vmatpush1.msra.mxu0 0.0
  %1082 = vmatprep.subr.mxu0 0.0
  %1083 = vmatpush1.msra.mxu0 0.0
  %1084 = vmatprep.subr.mxu0 0.0
  %1085 = vmatpush1.msra.mxu0 0.0
  %1086 = vmatprep.mubr.f32.mxu0 0.0
  %1087 = vmatmul.mubr.f32.gmra.mrb[0].mxu0 %v1020
  %v1088 = vpop.f32.mrb[0].mxu0
  %v1089 = vadd.f32 %v1018, %v1088
  %v1090 = vpop.f32.mrb[0].mxu0
  %1091 = vdwg.mxu0
  %v1092 = vld [vmem:[%s7 + $0x118] sm:$0xff]
  %v1093 = vld [vmem:[%s7 + $0x120] sm:$0xff]
  %v1094 = vld [vmem:[%s7 + $0x128] sm:$0xff]
  %v1095 = vld [vmem:[%s7 + $0x130] sm:$0xff]
  %v1096 = vld [vmem:[%s7 + $0x138] sm:$0xff]
  %v1097 = vld [vmem:[%s7 + $0x140] sm:$0xff]
  %v1098 = vld [vmem:[%s7 + $0x148] sm:$0xff]
  %v1099 = vld [vmem:[%s7 + $0x150] sm:$0xff]
  %v1101 = vsel %vm153, %v826, 0
  %1103 = vmatprep.subr.mxu0 0.0
  %1104 = vmatpush1.msra.mxu0 %v1096
  %1105 = vmatprep.subr.mxu0 0.0
  %1106 = vmatpush1.msra.mxu0 %v1097
  %1107 = vmatprep.subr.mxu0 0.0
  %1108 = vmatpush1.msra.mxu0 %v1098
  %1109 = vmatprep.subr.mxu0 0.0
  %1110 = vmatpush1.msra.mxu0 %v1099
  %1111 = vmatprep.subr.mxu0 0.0
  %1112 = vmatpush1.msra.mxu0 0.0
  %1113 = vmatprep.subr.mxu0 0.0
  %1114 = vmatpush1.msra.mxu0 0.0
  %1115 = vmatprep.subr.mxu0 0.0
  %1116 = vmatpush1.msra.mxu0 0.0
  %1117 = vmatprep.subr.mxu0 0.0
  %1118 = vmatpush1.msra.mxu0 0.0
  %1119 = vmatprep.subr.mxu0 0.0
  %1120 = vmatpush1.msra.mxu0 0.0
  %1121 = vmatprep.subr.mxu0 0.0
  %1122 = vmatpush1.msra.mxu0 0.0
  %1123 = vmatprep.subr.mxu0 0.0
  %1124 = vmatpush1.msra.mxu0 0.0
  %1125 = vmatprep.subr.mxu0 0.0
  %1126 = vmatpush1.msra.mxu0 0.0
  %1127 = vmatprep.subr.mxu0 0.0
  %1128 = vmatpush1.msra.mxu0 0.0
  %1129 = vmatprep.subr.mxu0 0.0
  %1130 = vmatpush1.msra.mxu0 0.0
  %1131 = vmatprep.subr.mxu0 0.0
  %1132 = vmatpush1.msra.mxu0 0.0
  %1133 = vmatprep.subr.mxu0 0.0
  %1134 = vmatpush1.msra.mxu0 0.0
  %1135 = vmatprep.subr.mxu0 0.0
  %1136 = vmatpush1.msra.mxu0 0.0
  %1137 = vmatprep.subr.mxu0 0.0
  %1138 = vmatpush1.msra.mxu0 0.0
  %1139 = vmatprep.subr.mxu0 0.0
  %1140 = vmatpush1.msra.mxu0 0.0
  %1141 = vmatprep.subr.mxu0 0.0
  %1142 = vmatpush1.msra.mxu0 0.0
  %1143 = vmatprep.subr.mxu0 0.0
  %1144 = vmatpush1.msra.mxu0 0.0
  %1145 = vmatprep.subr.mxu0 0.0
  %1146 = vmatpush1.msra.mxu0 0.0
  %1147 = vmatprep.subr.mxu0 0.0
  %1148 = vmatpush1.msra.mxu0 0.0
  %1149 = vmatprep.subr.mxu0 0.0
  %1150 = vmatpush1.msra.mxu0 0.0
  %1151 = vmatprep.subr.mxu0 0.0
  %1152 = vmatpush1.msra.mxu0 0.0
  %1153 = vmatprep.subr.mxu0 0.0
  %1154 = vmatpush1.msra.mxu0 0.0
  %1155 = vmatprep.subr.mxu0 0.0
  %1156 = vmatpush1.msra.mxu0 0.0
  %1157 = vmatprep.subr.mxu0 0.0
  %1158 = vmatpush1.msra.mxu0 0.0
  %1159 = vmatprep.subr.mxu0 0.0
  %1160 = vmatpush1.msra.mxu0 0.0
  %1161 = vmatprep.subr.mxu0 0.0
  %1162 = vmatpush1.msra.mxu0 0.0
  %1163 = vmatprep.subr.mxu0 0.0
  %1164 = vmatpush1.msra.mxu0 0.0
  %1165 = vmatprep.subr.mxu0 0.0
  %1166 = vmatpush1.msra.mxu0 0.0
  %1167 = vmatprep.mubr.f32.mxu0 0.0
  %1168 = vmatmul.mubr.f32.gmra.mrb[0].mxu0 %v1101
  %v1169 = vpop.f32.mrb[0].mxu0
  %v1170 = vadd.f32 0.0, %v1169
  %v1171 = vpop.f32.mrb[0].mxu0
  %1172 = vdwg.mxu0
  %v1174 = vsel %vm153, %v1089, 0
  %1176 = vmatprep.subr.mxu0 0.0
  %1177 = vmatpush1.msra.mxu0 %v1092
  %1178 = vmatprep.subr.mxu0 0.0
  %1179 = vmatpush1.msra.mxu0 %v1093
  %1180 = vmatprep.subr.mxu0 0.0
  %1181 = vmatpush1.msra.mxu0 %v1094
  %1182 = vmatprep.subr.mxu0 0.0
  %1183 = vmatpush1.msra.mxu0 %v1095
  %1184 = vmatprep.subr.mxu0 0.0
  %1185 = vmatpush1.msra.mxu0 0.0
  %1186 = vmatprep.subr.mxu0 0.0
  %1187 = vmatpush1.msra.mxu0 0.0
  %1188 = vmatprep.subr.mxu0 0.0
  %1189 = vmatpush1.msra.mxu0 0.0
  %1190 = vmatprep.subr.mxu0 0.0
  %1191 = vmatpush1.msra.mxu0 0.0
  %1192 = vmatprep.subr.mxu0 0.0
  %1193 = vmatpush1.msra.mxu0 0.0
  %1194 = vmatprep.subr.mxu0 0.0
  %1195 = vmatpush1.msra.mxu0 0.0
  %1196 = vmatprep.subr.mxu0 0.0
  %1197 = vmatpush1.msra.mxu0 0.0
  %1198 = vmatprep.subr.mxu0 0.0
  %1199 = vmatpush1.msra.mxu0 0.0
  %1200 = vmatprep.subr.mxu0 0.0
  %1201 = vmatpush1.msra.mxu0 0.0
  %1202 = vmatprep.subr.mxu0 0.0
  %1203 = vmatpush1.msra.mxu0 0.0
  %1204 = vmatprep.subr.mxu0 0.0
  %1205 = vmatpush1.msra.mxu0 0.0
  %1206 = vmatprep.subr.mxu0 0.0
  %1207 = vmatpush1.msra.mxu0 0.0
  %1208 = vmatprep.subr.mxu0 0.0
  %1209 = vmatpush1.msra.mxu0 0.0
  %1210 = vmatprep.subr.mxu0 0.0
  %1211 = vmatpush1.msra.mxu0 0.0
  %1212 = vmatprep.subr.mxu0 0.0
  %1213 = vmatpush1.msra.mxu0 0.0
  %1214 = vmatprep.subr.mxu0 0.0
  %1215 = vmatpush1.msra.mxu0 0.0
  %1216 = vmatprep.subr.mxu0 0.0
  %1217 = vmatpush1.msra.mxu0 0.0
  %1218 = vmatprep.subr.mxu0 0.0
  %1219 = vmatpush1.msra.mxu0 0.0
  %1220 = vmatprep.subr.mxu0 0.0
  %1221 = vmatpush1.msra.mxu0 0.0
  %1222 = vmatprep.subr.mxu0 0.0
  %1223 = vmatpush1.msra.mxu0 0.0
  %1224 = vmatprep.subr.mxu0 0.0
  %1225 = vmatpush1.msra.mxu0 0.0
  %1226 = vmatprep.subr.mxu0 0.0
  %1227 = vmatpush1.msra.mxu0 0.0
  %1228 = vmatprep.subr.mxu0 0.0
  %1229 = vmatpush1.msra.mxu0 0.0
  %1230 = vmatprep.subr.mxu0 0.0
  %1231 = vmatpush1.msra.mxu0 0.0
  %1232 = vmatprep.subr.mxu0 0.0
  %1233 = vmatpush1.msra.mxu0 0.0
  %1234 = vmatprep.subr.mxu0 0.0
  %1235 = vmatpush1.msra.mxu0 0.0
  %1236 = vmatprep.subr.mxu0 0.0
  %1237 = vmatpush1.msra.mxu0 0.0
  %1238 = vmatprep.subr.mxu0 0.0
  %1239 = vmatpush1.msra.mxu0 0.0
  %1240 = vmatprep.mubr.f32.mxu0 0.0
  %1241 = vmatmul.mubr.f32.gmra.mrb[0].mxu0 %v1174
  %v1242 = vpop.f32.mrb[0].mxu0
  %v1243 = vadd.f32 %v1170, %v1242
  %v1244 = vpop.f32.mrb[0].mxu0
  %1245 = vdwg.mxu0
  %v1246 = vld [vmem:[%s7 + $0x158] sm:$0x1]
  %v1247 = vlaneseq
  %v1248 = vshrl.u32 %v1247, 7
  %v1249 = vsub.s32 0, %v1248
  %v1250 = vrot.slane %v1246, %v1249
  %v1251 = vadd.f32 %v1243, %v1250
  %vm1252 = vcmp.gt.f32.partialorder %v1251, 0.0
  %v1253 = vmul.f32 %v1251, 1.442695
  %v1254 = vpow.pop %v1253
  %v1255 = vsub.f32 %v1254, 1.0
  %v1256 = vsel %vm1252, %v1251, %v1255
  %v1257 = vld [vmem:[%s7 + $0x160] sm:$0xff]
  %v1258 = vld [vmem:[%s7 + $0x168] sm:$0xff]
  %v1259 = vld [vmem:[%s7 + $0x170] sm:$0xff]
  %v1260 = vld [vmem:[%s7 + $0x178] sm:$0xff]
  %v1261 = vld [vmem:[%s7 + $0x180] sm:$0x1]
  %v1262 = vlaneseq
  %v1263 = vshrl.u32 %v1262, 7
  %v1264 = vsub.s32 0, %v1263
  %v1265 = vrot.slane %v1261, %v1264
  %v1267 = vsel %vm153, %v1256, 0
  %1269 = vmatprep.subr.mxu0 0.0
  %1270 = vmatpush1.msra.mxu0 %v1257
  %1271 = vmatprep.subr.mxu0 0.0
  %1272 = vmatpush1.msra.mxu0 %v1258
  %1273 = vmatprep.subr.mxu0 0.0
  %1274 = vmatpush1.msra.mxu0 %v1259
  %1275 = vmatprep.subr.mxu0 0.0
  %1276 = vmatpush1.msra.mxu0 %v1260
  %1277 = vmatprep.subr.mxu0 0.0
  %1278 = vmatpush1.msra.mxu0 0.0
  %1279 = vmatprep.subr.mxu0 0.0
  %1280 = vmatpush1.msra.mxu0 0.0
  %1281 = vmatprep.subr.mxu0 0.0
  %1282 = vmatpush1.msra.mxu0 0.0
  %1283 = vmatprep.subr.mxu0 0.0
  %1284 = vmatpush1.msra.mxu0 0.0
  %1285 = vmatprep.subr.mxu0 0.0
  %1286 = vmatpush1.msra.mxu0 0.0
  %1287 = vmatprep.subr.mxu0 0.0
  %1288 = vmatpush1.msra.mxu0 0.0
  %1289 = vmatprep.subr.mxu0 0.0
  %1290 = vmatpush1.msra.mxu0 0.0
  %1291 = vmatprep.subr.mxu0 0.0
  %1292 = vmatpush1.msra.mxu0 0.0
  %1293 = vmatprep.subr.mxu0 0.0
  %1294 = vmatpush1.msra.mxu0 0.0
  %1295 = vmatprep.subr.mxu0 0.0
  %1296 = vmatpush1.msra.mxu0 0.0
  %1297 = vmatprep.subr.mxu0 0.0
  %1298 = vmatpush1.msra.mxu0 0.0
  %1299 = vmatprep.subr.mxu0 0.0
  %1300 = vmatpush1.msra.mxu0 0.0
  %1301 = vmatprep.subr.mxu0 0.0
  %1302 = vmatpush1.msra.mxu0 0.0
  %1303 = vmatprep.subr.mxu0 0.0
  %1304 = vmatpush1.msra.mxu0 0.0
  %1305 = vmatprep.subr.mxu0 0.0
  %1306 = vmatpush1.msra.mxu0 0.0
  %1307 = vmatprep.subr.mxu0 0.0
  %1308 = vmatpush1.msra.mxu0 0.0
  %1309 = vmatprep.subr.mxu0 0.0
  %1310 = vmatpush1.msra.mxu0 0.0
  %1311 = vmatprep.subr.mxu0 0.0
  %1312 = vmatpush1.msra.mxu0 0.0
  %1313 = vmatprep.subr.mxu0 0.0
  %1314 = vmatpush1.msra.mxu0 0.0
  %1315 = vmatprep.subr.mxu0 0.0
  %1316 = vmatpush1.msra.mxu0 0.0
  %1317 = vmatprep.subr.mxu0 0.0
  %1318 = vmatpush1.msra.mxu0 0.0
  %1319 = vmatprep.subr.mxu0 0.0
  %1320 = vmatpush1.msra.mxu0 0.0
  %1321 = vmatprep.subr.mxu0 0.0
  %1322 = vmatpush1.msra.mxu0 0.0
  %1323 = vmatprep.subr.mxu0 0.0
  %1324 = vmatpush1.msra.mxu0 0.0
  %1325 = vmatprep.subr.mxu0 0.0
  %1326 = vmatpush1.msra.mxu0 0.0
  %1327 = vmatprep.subr.mxu0 0.0
  %1328 = vmatpush1.msra.mxu0 0.0
  %1329 = vmatprep.subr.mxu0 0.0
  %1330 = vmatpush1.msra.mxu0 0.0
  %1331 = vmatprep.subr.mxu0 0.0
  %1332 = vmatpush1.msra.mxu0 0.0
  %1333 = vmatprep.mubr.f32.mxu0 0.0
  %1334 = vmatmul.mubr.f32.gmra.mrb[0].mxu0 %v1267
  %v1335 = vpop.f32.mrb[0].mxu0
  %v1336 = vadd.f32 %v1265, %v1335
  %v1337 = vpop.f32.mrb[0].mxu0
  %1338 = vdwg.mxu0
  %vm1339 = vcmask 259072
  %1340 = vst.msk [vmem:[%s8] sm:$0x3f] %vm1339, %v1336
  // Predicated region
  $region34: #{samplenet_forward.1} parent=0 // pred_check
    _
  $region35: #{samplenet_forward.1} parent=0 // pred_check_branch
    %1342 = sbr.rel (0) target = $region37
  $region36: #{samplenet_forward.1} parent=0 // pred_region
    _
  $region37: #{samplenet_forward.1} parent=0 // pred_fallthru
    _
  // Predicated region
  $region38: #{samplenet_forward.1} parent=0 // pred_check
    _
  $region39: #{samplenet_forward.1} parent=0 // pred_check_branch
    %1344 = sbr.rel (0) target = $region41
  $region40: #{samplenet_forward.1} parent=0 // pred_region
    _
  $region41: #{samplenet_forward.1} parent=0 // pred_fallthru
    _

</llo_original>
